<compile_context>
chip_gen: v7x
topology: tpu7x:2x2x1
jax: 0.10.0
libtpu: 0.0.40
codegen_flags: <defaults>
</compile_context>

<pallas_src>
import functools
import itertools

import jax
import jax.numpy as jnp
from jax import lax
from jax.experimental import pallas as pl
from jax.experimental.pallas import tpu as pltpu


def _cosmoflow_block_kernel(p_ref, w_ref, b_ref, o_ref, *,
                            negative_slope, fuse_act_after_max):
    """One (batch, R-tile) grid step.

    p_ref: (1, 8, KC, TM)  im2col patches (pool-window position, K^3*Cin, rows)
    w_ref: (Cout, KC)      flattened Conv3d weights (tap-major, Cin-minor)
    b_ref: (Cout, 1)       Conv3d bias (f32)
    o_ref: (1, Cout, TM)   pooled output tile (lane-dense: TM on the lane axis)
    """
    w = w_ref[...]
    b = b_ref[...]

    def leaky(z):
        return jnp.where(z >= 0, z, negative_slope * z)

    pooled = None
    for q in range(p_ref.shape[1]):               # 8 pool positions, unrolled
        z = jnp.dot(w, p_ref[0, q], preferred_element_type=jnp.float32)
        if not fuse_act_after_max:                # only needed if slope < 0
            z = leaky(z + b)
        pooled = z if pooled is None else jnp.maximum(pooled, z)
    if fuse_act_after_max:
        pooled = leaky(pooled + b)                # monotone -> commutes with max
    o_ref[0] = pooled.astype(o_ref.dtype)


def _vmem_budget():
    """(tile_budget_bytes, vmem_limit_bytes), generation-aware with safe fallback."""
    cap = 64 * 1024 * 1024                        # conservative default (v7x per-TC)
    try:
        cap = int(pltpu.get_tpu_info().vmem_capacity_bytes)
    except Exception:
        pass
    cap = max(32 * 1024 * 1024, min(cap, 128 * 1024 * 1024))
    budget = min(int(cap * 0.55), 72 * 1024 * 1024)
    limit = min(int(cap * 0.85), 100 * 1024 * 1024)
    return budget, limit


def _choose_row_tile(R, KC, Cout, patch_bytes, out_bytes, budget, max_tm=2048):
    """Largest R-tile (multiple of 128, dividing R, capped) fitting the VMEM budget."""
    def footprint(tm):
        return (2 * 8 * KC * tm * patch_bytes     # double-buffered patch block
                + 2 * Cout * tm * out_bytes       # double-buffered output block
                + 2 * Cout * KC * patch_bytes     # weight block (constant index map)
                + 2 * Cout * 4)                   # bias block
    if R <= max_tm and footprint(R) <= budget:
        return R
    best = None
    for tm in range(128, min(R, max_tm) + 1, 128):
        if R % tm == 0 and footprint(tm) <= budget:
            best = tm
    if best is None:
        # TODO(synk): ragged R-tiling / KC (contraction) grid axis for huge KC
        # with R not a multiple of 128; fall back to whole-R blocks.
        best = R
    return best


def cosmoflow_conv_block(x, weight, bias, *, kernel_size=3,
                         negative_slope=0.01, compute_dtype=jnp.bfloat16):
    """x: [N, Cin, D, H, W] (NCDHW). Returns [N, Cout, D//2, H//2, W//2]."""
    N, Cin, D, H, W = x.shape
    Cout = weight.shape[0]
    K = kernel_size
    # padding='same' with odd kernel -> symmetric Conv3d padding of (K-1)//2.
    # TODO(synk): even-kernel 'same' (TF-style ConstantPad3d) branch not implemented.
    assert K % 2 == 1, "only the odd-kernel 'same' branch is implemented"
    pad = (K - 1) // 2
    Dh, Hh, Wh = D // 2, H // 2, W // 2            # MaxPool3d(2,2) floors odd dims
    R = Dh * Hh * Wh
    KC = K * K * K * Cin

    # ---- glue: zero pad + im2col grouped by pool-window position, R-minor layout.
    xp = jnp.pad(x, ((0, 0), (0, 0), (pad, pad), (pad, pad), (pad, pad)))
    groups = []
    for a, b2, c in itertools.product((0, 1), repeat=3):   # position in 2x2x2 window
        taps = []
        for kd in range(K):
            for kh in range(K):
                for kw in range(K):
                    slab = xp[:, :,
                              a + kd: a + kd + 2 * Dh: 2,
                              b2 + kh: b2 + kh + 2 * Hh: 2,
                              c + kw: c + kw + 2 * Wh: 2]   # [N, Cin, Dh, Hh, Wh]
                    taps.append(slab.reshape(N, Cin, R))
        g = jnp.stack(taps, axis=1)                         # [N, K^3, Cin, R]
        groups.append(g.reshape(N, KC, R))
    patches = jnp.stack(groups, axis=1).astype(compute_dtype)   # [N, 8, KC, R]

    # Conv3d weight [Cout, Cin, K, K, K] -> [Cout, K^3*Cin] (tap-major, Cin-minor).
    w2d = jnp.transpose(weight, (0, 2, 3, 4, 1)).reshape(Cout, KC).astype(compute_dtype)
    b2d = bias.reshape(Cout, 1).astype(jnp.float32)          # applied post-matmul in f32

    out_dtype = x.dtype
    patch_bytes = jnp.dtype(compute_dtype).itemsize
    out_bytes = jnp.dtype(out_dtype).itemsize
    budget, vmem_limit = _vmem_budget()
    TM = _choose_row_tile(R, KC, Cout, patch_bytes, out_bytes, budget)
    assert R % TM == 0
    num_r_tiles = R // TM

    kernel = functools.partial(_cosmoflow_block_kernel,
                               negative_slope=negative_slope,
                               fuse_act_after_max=(negative_slope >= 0))
    out2d = pl.pallas_call(
        kernel,
        out_shape=jax.ShapeDtypeStruct((N, Cout, R), out_dtype),
        grid_spec=pltpu.PrefetchScalarGridSpec(
            num_scalar_prefetch=0,
            grid=(N, num_r_tiles),
            in_specs=[
                pl.BlockSpec((1, 8, KC, TM), lambda n, r: (n, 0, 0, r)),
                # Weight / bias: constant index maps -> fetched once, stay resident.
                pl.BlockSpec((Cout, KC), lambda n, r: (0, 0)),
                pl.BlockSpec((Cout, 1), lambda n, r: (0, 0)),
            ],
            out_specs=pl.BlockSpec((1, Cout, TM), lambda n, r: (n, 0, r)),
        ),
        compiler_params=pltpu.CompilerParams(
            dimension_semantics=("parallel", "parallel"),
            vmem_limit_bytes=vmem_limit),
    )(patches, w2d, b2d)

    # Lane-dense (N, Cout, R) output -> NCDHW is a pure reshape (no transpose).
    return out2d.reshape(N, Cout, Dh, Hh, Wh)


def reference(x, weight, bias, negative_slope=0.01):
    """Plain-JAX reference: Conv3d('same') + LeakyReLU + MaxPool3d(2,2)."""
    pad = (weight.shape[-1] - 1) // 2
    y = lax.conv_general_dilated(
        x, weight, window_strides=(1, 1, 1), padding=[(pad, pad)] * 3,
        dimension_numbers=('NCDHW', 'OIDHW', 'NCDHW'),
        precision=lax.Precision.HIGHEST)
    y = y + bias.reshape(1, -1, 1, 1, 1)
    y = jnp.where(y >= 0, y, negative_slope * y)
    y = lax.reduce_window(y, -jnp.inf, lax.max,
                          window_dimensions=(1, 1, 2, 2, 2),
                          window_strides=(1, 1, 2, 2, 2),
                          padding='VALID')
    return y


if __name__ == "__main__":
    key = jax.random.PRNGKey(0)
    kx, kw, kb = jax.random.split(key, 3)

    N, Cin, Cout, S, K = 2, 4, 8, 16, 3
    x = jax.random.normal(kx, (N, Cin, S, S, S), dtype=jnp.float32)

    # Deterministic Conv3d-style init (uniform in +/- 1/sqrt(fan_in)).
    fan_in = Cin * K * K * K
    bound = 1.0 / (fan_in ** 0.5)
    weight = jax.random.uniform(kw, (Cout, Cin, K, K, K), jnp.float32, -bound, bound)
    bias = jax.random.uniform(kb, (Cout,), jnp.float32, -bound, bound)

    out = jax.jit(cosmoflow_conv_block)(x, weight, bias)
    out = jax.block_until_ready(out)

    assert out.shape == (N, Cout, S // 2, S // 2, S // 2), out.shape
    ref = reference(x, weight, bias)
    max_err = float(jnp.max(jnp.abs(out - ref)))
    # bf16 matmul inputs (f32 accumulation) vs f32 HIGHEST-precision reference.
    assert max_err < 5e-2, f"max abs err {max_err}"
    print("KERNEL_OK")
</pallas_src>

<mosaic_0001>
module attributes {stable_mosaic.version = 11 : i64} {
  func.func @_cosmoflow_block_kernel(%arg0: i32, %arg1: i32, %arg2: memref<1x8x108x512xbf16, #tpu.memory_space<vmem>>, %arg3: memref<8x108xbf16, #tpu.memory_space<vmem>>, %arg4: memref<8x1xf32, #tpu.memory_space<vmem>>, %arg5: memref<1x8x512xf32, #tpu.memory_space<vmem>>) attributes {dimension_semantics = [#tpu.dimension_semantics<parallel>, #tpu.dimension_semantics<parallel>], iteration_bounds = array<i64: 2, 1>, scalar_prefetch = 0 : i64, scratch_operands = 0 : i64, tpu.core_type = #tpu.core_type<tc>, window_params = [{transform_indices = @transform_0, window_bounds = array<i64: 1, 8, 108, 512>}, {pipeline_mode = #tpu.pipeline_mode<synchronous>, transform_indices = @transform_1, window_bounds = array<i64: 8, 108>}, {pipeline_mode = #tpu.pipeline_mode<synchronous>, transform_indices = @transform_2, window_bounds = array<i64: 8, 1>}, {transform_indices = @transform_3, window_bounds = array<i64: 1, 8, 512>}]} {
    %c0 = arith.constant 0 : index
    %c0_0 = arith.constant 0 : index
    %0 = vector.load %arg3[%c0, %c0_0] : memref<8x108xbf16, #tpu.memory_space<vmem>>, vector<8x108xbf16>
    %c0_1 = arith.constant 0 : index
    %c0_2 = arith.constant 0 : index
    %1 = vector.load %arg4[%c0_1, %c0_2] : memref<8x1xf32, #tpu.memory_space<vmem>>, vector<8x1xf32>
    %c0_3 = arith.constant 0 : index
    %c0_4 = arith.constant 0 : index
    %c0_5 = arith.constant 0 : index
    %c0_6 = arith.constant 0 : index
    %2 = vector.load %arg2[%c0_3, %c0_4, %c0_5, %c0_6] : memref<1x8x108x512xbf16, #tpu.memory_space<vmem>>, vector<1x1x108x512xbf16>
    %3 = vector.shape_cast %2 : vector<1x1x108x512xbf16> to vector<108x512xbf16>
    %cst = arith.constant dense<0.000000e+00> : vector<8x512xf32>
    %4 = tpu.matmul %0, %3, %cst {dimension_numbers = #tpu.dot_dimension_numbers<[1], [0], [0], [1], [0, 0, 1, 1], [], []>} : vector<8x108xbf16>, vector<108x512xbf16>, vector<8x512xf32> -> vector<8x512xf32>
    %c0_7 = arith.constant 0 : index
    %c1 = arith.constant 1 : index
    %c0_8 = arith.constant 0 : index
    %c0_9 = arith.constant 0 : index
    %5 = vector.load %arg2[%c0_7, %c1, %c0_8, %c0_9] : memref<1x8x108x512xbf16, #tpu.memory_space<vmem>>, vector<1x1x108x512xbf16>
    %6 = vector.shape_cast %5 : vector<1x1x108x512xbf16> to vector<108x512xbf16>
    %cst_10 = arith.constant dense<0.000000e+00> : vector<8x512xf32>
    %7 = tpu.matmul %0, %6, %cst_10 {dimension_numbers = #tpu.dot_dimension_numbers<[1], [0], [0], [1], [0, 0, 1, 1], [], []>} : vector<8x108xbf16>, vector<108x512xbf16>, vector<8x512xf32> -> vector<8x512xf32>
    %8 = arith.maximumf %4, %7 : vector<8x512xf32>
    %c0_11 = arith.constant 0 : index
    %c2 = arith.constant 2 : index
    %c0_12 = arith.constant 0 : index
    %c0_13 = arith.constant 0 : index
    %9 = vector.load %arg2[%c0_11, %c2, %c0_12, %c0_13] : memref<1x8x108x512xbf16, #tpu.memory_space<vmem>>, vector<1x1x108x512xbf16>
    %10 = vector.shape_cast %9 : vector<1x1x108x512xbf16> to vector<108x512xbf16>
    %cst_14 = arith.constant dense<0.000000e+00> : vector<8x512xf32>
    %11 = tpu.matmul %0, %10, %cst_14 {dimension_numbers = #tpu.dot_dimension_numbers<[1], [0], [0], [1], [0, 0, 1, 1], [], []>} : vector<8x108xbf16>, vector<108x512xbf16>, vector<8x512xf32> -> vector<8x512xf32>
    %12 = arith.maximumf %8, %11 : vector<8x512xf32>
    %c0_15 = arith.constant 0 : index
    %c3 = arith.constant 3 : index
    %c0_16 = arith.constant 0 : index
    %c0_17 = arith.constant 0 : index
    %13 = vector.load %arg2[%c0_15, %c3, %c0_16, %c0_17] : memref<1x8x108x512xbf16, #tpu.memory_space<vmem>>, vector<1x1x108x512xbf16>
    %14 = vector.shape_cast %13 : vector<1x1x108x512xbf16> to vector<108x512xbf16>
    %cst_18 = arith.constant dense<0.000000e+00> : vector<8x512xf32>
    %15 = tpu.matmul %0, %14, %cst_18 {dimension_numbers = #tpu.dot_dimension_numbers<[1], [0], [0], [1], [0, 0, 1, 1], [], []>} : vector<8x108xbf16>, vector<108x512xbf16>, vector<8x512xf32> -> vector<8x512xf32>
    %16 = arith.maximumf %12, %15 : vector<8x512xf32>
    %c0_19 = arith.constant 0 : index
    %c4 = arith.constant 4 : index
    %c0_20 = arith.constant 0 : index
    %c0_21 = arith.constant 0 : index
    %17 = vector.load %arg2[%c0_19, %c4, %c0_20, %c0_21] : memref<1x8x108x512xbf16, #tpu.memory_space<vmem>>, vector<1x1x108x512xbf16>
    %18 = vector.shape_cast %17 : vector<1x1x108x512xbf16> to vector<108x512xbf16>
    %cst_22 = arith.constant dense<0.000000e+00> : vector<8x512xf32>
    %19 = tpu.matmul %0, %18, %cst_22 {dimension_numbers = #tpu.dot_dimension_numbers<[1], [0], [0], [1], [0, 0, 1, 1], [], []>} : vector<8x108xbf16>, vector<108x512xbf16>, vector<8x512xf32> -> vector<8x512xf32>
    %20 = arith.maximumf %16, %19 : vector<8x512xf32>
    %c0_23 = arith.constant 0 : index
    %c5 = arith.constant 5 : index
    %c0_24 = arith.constant 0 : index
    %c0_25 = arith.constant 0 : index
    %21 = vector.load %arg2[%c0_23, %c5, %c0_24, %c0_25] : memref<1x8x108x512xbf16, #tpu.memory_space<vmem>>, vector<1x1x108x512xbf16>
    %22 = vector.shape_cast %21 : vector<1x1x108x512xbf16> to vector<108x512xbf16>
    %cst_26 = arith.constant dense<0.000000e+00> : vector<8x512xf32>
    %23 = tpu.matmul %0, %22, %cst_26 {dimension_numbers = #tpu.dot_dimension_numbers<[1], [0], [0], [1], [0, 0, 1, 1], [], []>} : vector<8x108xbf16>, vector<108x512xbf16>, vector<8x512xf32> -> vector<8x512xf32>
    %24 = arith.maximumf %20, %23 : vector<8x512xf32>
    %c0_27 = arith.constant 0 : index
    %c6 = arith.constant 6 : index
    %c0_28 = arith.constant 0 : index
    %c0_29 = arith.constant 0 : index
    %25 = vector.load %arg2[%c0_27, %c6, %c0_28, %c0_29] : memref<1x8x108x512xbf16, #tpu.memory_space<vmem>>, vector<1x1x108x512xbf16>
    %26 = vector.shape_cast %25 : vector<1x1x108x512xbf16> to vector<108x512xbf16>
    %cst_30 = arith.constant dense<0.000000e+00> : vector<8x512xf32>
    %27 = tpu.matmul %0, %26, %cst_30 {dimension_numbers = #tpu.dot_dimension_numbers<[1], [0], [0], [1], [0, 0, 1, 1], [], []>} : vector<8x108xbf16>, vector<108x512xbf16>, vector<8x512xf32> -> vector<8x512xf32>
    %28 = arith.maximumf %24, %27 : vector<8x512xf32>
    %c0_31 = arith.constant 0 : index
    %c7 = arith.constant 7 : index
    %c0_32 = arith.constant 0 : index
    %c0_33 = arith.constant 0 : index
    %29 = vector.load %arg2[%c0_31, %c7, %c0_32, %c0_33] : memref<1x8x108x512xbf16, #tpu.memory_space<vmem>>, vector<1x1x108x512xbf16>
    %30 = vector.shape_cast %29 : vector<1x1x108x512xbf16> to vector<108x512xbf16>
    %cst_34 = arith.constant dense<0.000000e+00> : vector<8x512xf32>
    %31 = tpu.matmul %0, %30, %cst_34 {dimension_numbers = #tpu.dot_dimension_numbers<[1], [0], [0], [1], [0, 0, 1, 1], [], []>} : vector<8x108xbf16>, vector<108x512xbf16>, vector<8x512xf32> -> vector<8x512xf32>
    %32 = arith.maximumf %28, %31 : vector<8x512xf32>
    %33 = vector.broadcast %1 : vector<8x1xf32> to vector<8x512xf32>
    %34 = arith.addf %32, %33 : vector<8x512xf32>
    %cst_35 = arith.constant 0.000000e+00 : f32
    %35 = vector.broadcast %cst_35 : f32 to vector<8x512xf32>
    %36 = arith.cmpf oge, %34, %35 : vector<8x512xf32>
    %cst_36 = arith.constant 0.00999999977 : f32
    %37 = vector.broadcast %cst_36 : f32 to vector<8x512xf32>
    %38 = arith.mulf %37, %34 : vector<8x512xf32>
    %39 = arith.select %36, %34, %38 : vector<8x512xi1>, vector<8x512xf32>
    %c0_37 = arith.constant 0 : index
    %c0_38 = arith.constant 0 : index
    %c0_39 = arith.constant 0 : index
    %40 = vector.load %arg5[%c0_37, %c0_38, %c0_39] : memref<1x8x512xf32, #tpu.memory_space<vmem>>, vector<1x8x512xf32>
    %41 = vector.shape_cast %40 : vector<1x8x512xf32> to vector<8x512xf32>
    %42 = vector.shape_cast %39 : vector<8x512xf32> to vector<1x8x512xf32>
    tpu.vector_store %arg5[%c0_37, %c0_38, %c0_39], %42 {strides = array<i32>} : memref<1x8x512xf32, #tpu.memory_space<vmem>>, vector<1x8x512xf32>,
    return
  }
  func.func @transform_0(%arg0: i32, %arg1: i32) -> (i32, i32, i32, i32) {
    %c0_i32 = arith.constant 0 : i32
    %c0_i32_0 = arith.constant 0 : i32
    %c0_i32_1 = arith.constant 0 : i32
    return %arg0, %c0_i32, %c0_i32_0, %arg1 : i32, i32, i32, i32
  }
  func.func @transform_1(%arg0: i32, %arg1: i32) -> (i32, i32) {
    %c0_i32 = arith.constant 0 : i32
    %c0_i32_0 = arith.constant 0 : i32
    %c0_i32_1 = arith.constant 0 : i32
    return %c0_i32, %c0_i32_0 : i32, i32
  }
  func.func @transform_2(%arg0: i32, %arg1: i32) -> (i32, i32) {
    %c0_i32 = arith.constant 0 : i32
    %c0_i32_0 = arith.constant 0 : i32
    %c0_i32_1 = arith.constant 0 : i32
    return %c0_i32, %c0_i32_0 : i32, i32
  }
  func.func @transform_3(%arg0: i32, %arg1: i32) -> (i32, i32, i32) {
    %c0_i32 = arith.constant 0 : i32
    %c0_i32_0 = arith.constant 0 : i32
    return %arg0, %c0_i32, %arg1 : i32, i32, i32
  }
}

</mosaic_0001>

<llo_original>
// kernel: cosmoflow_conv_block.1
$region0: #{cosmoflow_conv_block.1}
  #allocation0 [shape = 'u32[]', space=smem, size = 0x4, offset = 0x4, fixed_abs, tag = 'smem constant byte address 0x4 - core index']
  #allocation1 [shape = 'u32[144,128]{1,0:T(1,128)}', space=vmem, size = 0x12000, scoped, tag = 'internal scratch']
  %s0 = inlined_call_operand.vmem [shape: bf16[2,8,108,512], index: 0, kind: input, shape index: {}]
  %s1 = inlined_call_operand.vmem [shape: bf16[8,108], index: 1, kind: input, shape index: {}]
  %s2 = inlined_call_operand.vmem [shape: f32[8,1], index: 2, kind: input, shape index: {}]
  %s3 = inlined_call_operand.vmem [shape: f32[2,8,512], index: 3, kind: output, shape index: {}]
  %s4 = sld [smem:[#allocation0]]
  $region45: #{cosmoflow_conv_block.1} parent=0
    _
  %s6 = ssub.s32 1, %s4
  %s7 = scalar_select 0, %s6, %s4
  loop: start=0, step=1, limit=4
  $region2: #{cosmoflow_conv_block.1} parent=0 // loop_pre_header
    _
  $region3: #{cosmoflow_conv_block.1} parent=0 // loop_header
    %s9 = sphi 0, %s13
    %p10 = scmp.ge.s32.totalorder %s9, 4
    %s16 = sphi 0, %s28
    %s17 = sphi 0, %s24
    %s18 = sphi 0, %s16
    %s19 = sphi 0, %s17
    %s20 = sphi 0, %s18
    %s21 = sphi 0, %s19
    %s33 = sphi 0, %s35
    %s36 = sphi 0, %s33
    %s37 = sphi 0, %s36
    %s53 = sphi 0, %s37
    %s57 = sphi 0, %s57
    %s59 = sphi 0, %s57
    %s60 = sphi 0, %s59
    %s74 = sphi 0, %s60
    %s78 = sphi 0, %s78
    %s80 = sphi 0, %s78
    %s81 = sphi 0, %s80
    %s95 = sphi 0, %s81
    %s103 = sphi 0, %s105
    %s106 = sphi 0, %s103
    %s107 = sphi 0, %s106
    %s123 = sphi 0, %s107
  $region4: #{cosmoflow_conv_block.1} parent=0 // loop_header_branch
    %12 = sbr.rel (%p10) target = $region8
  $region5: #{cosmoflow_conv_block.1} parent=0 // loop_body
    %s14 = ssub.s32 %s9, 1
    %s15 = ssub.s32 %s9, 2
    %s22 = sadd.s32 1, %s17
    %p23 = scmp.ge.s32.totalorder %s22, 1
    %s24 = scalar_select %p23, 0, %s22
    %s25 = sadd.s32 1, %s16
    %s26 = scalar_select %p23, %s25, %s16
    %p27 = scmp.ge.s32.totalorder %s26, 2
    %s28 = scalar_select %p27, 0, %s26
    %s29 = ssub.s32 %s16, %s28
    %s30 = ssub.s32 %s17, %s24
    %s31 = sor.u32 %s29, %s30
    %p32 = scmp.eq.s32.totalorder %s31, 0
    %s34 = sadd.s32 %s33, 1
    %s35 = scalar_select %p32, %s33, %s34
    %p38 = pneg %p32
    %p39 = scmp.eq.s32.totalorder %s9, 1
    %p40 = por %p38, %p39
    %p41 = scmp.ne.s32.totalorder %s33, %s36
    %p42 = scmp.eq.s32.totalorder %s9, 0
    %p43 = por %p41, %p42
    %p44 = scmp.ne.s32.totalorder %s33, %s36
    %p45 = scmp.eq.s32.totalorder %s14, 1
    %p46 = por %p44, %p45
    %p47 = scmp.ne.s32.totalorder %s36, %s37
    %p48 = scmp.eq.s32.totalorder %s14, 0
    %p49 = por %p47, %p48
    %p50 = scmp.ne.s32.totalorder %s36, %s37
    %p51 = scmp.eq.s32.totalorder %s15, 1
    %p52 = por %p50, %p51
    %p54 = scmp.ne.s32.totalorder %s37, %s53
    %p55 = scmp.eq.s32.totalorder %s15, 0
    %p56 = por %p54, %p55
    %s58 = sadd.s32 %s57, 1
    %p61 = scmp.eq.s32.totalorder %s9, 1
    %p62 = scmp.ne.s32.totalorder %s57, %s59
    %p63 = scmp.eq.s32.totalorder %s9, 0
    %p64 = por %p62, %p63
    %p65 = scmp.ne.s32.totalorder %s57, %s59
    %p66 = scmp.eq.s32.totalorder %s14, 1
    %p67 = por %p65, %p66
    %p68 = scmp.ne.s32.totalorder %s59, %s60
    %p69 = scmp.eq.s32.totalorder %s14, 0
    %p70 = por %p68, %p69
    %p71 = scmp.ne.s32.totalorder %s59, %s60
    %p72 = scmp.eq.s32.totalorder %s15, 1
    %p73 = por %p71, %p72
    %p75 = scmp.ne.s32.totalorder %s60, %s74
    %p76 = scmp.eq.s32.totalorder %s15, 0
    %p77 = por %p75, %p76
    %s79 = sadd.s32 %s78, 1
    %p82 = scmp.eq.s32.totalorder %s9, 1
    %p83 = scmp.ne.s32.totalorder %s78, %s80
    %p84 = scmp.eq.s32.totalorder %s9, 0
    %p85 = por %p83, %p84
    %p86 = scmp.ne.s32.totalorder %s78, %s80
    %p87 = scmp.eq.s32.totalorder %s14, 1
    %p88 = por %p86, %p87
    %p89 = scmp.ne.s32.totalorder %s80, %s81
    %p90 = scmp.eq.s32.totalorder %s14, 0
    %p91 = por %p89, %p90
    %p92 = scmp.ne.s32.totalorder %s80, %s81
    %p93 = scmp.eq.s32.totalorder %s15, 1
    %p94 = por %p92, %p93
    %p96 = scmp.ne.s32.totalorder %s81, %s95
    %p97 = scmp.eq.s32.totalorder %s15, 0
    %p98 = por %p96, %p97
    %s99 = ssub.s32 %s16, %s28
    %s100 = ssub.s32 %s17, %s24
    %s101 = sor.u32 %s99, %s100
    %p102 = scmp.eq.s32.totalorder %s101, 0
    %s104 = sadd.s32 %s103, 1
    %s105 = scalar_select %p102, %s103, %s104
    %p108 = pneg %p102
    %p109 = scmp.eq.s32.totalorder %s9, 1
    %p110 = por %p108, %p109
    %p111 = scmp.ne.s32.totalorder %s103, %s106
    %p112 = scmp.eq.s32.totalorder %s9, 0
    %p113 = por %p111, %p112
    %p114 = scmp.ne.s32.totalorder %s103, %s106
    %p115 = scmp.eq.s32.totalorder %s14, 1
    %p116 = por %p114, %p115
    %p117 = scmp.ne.s32.totalorder %s106, %s107
    %p118 = scmp.eq.s32.totalorder %s14, 0
    %p119 = por %p117, %p118
    %p120 = scmp.ne.s32.totalorder %s106, %s107
    %p121 = scmp.eq.s32.totalorder %s15, 1
    %p122 = por %p120, %p121
    %p124 = scmp.ne.s32.totalorder %s107, %s123
    %p125 = scmp.eq.s32.totalorder %s15, 0
    %p126 = por %p124, %p125
    %p127 = scmp.le.s32.totalorder 1, %s9
    %p128 = scmp.lt.s32.totalorder %s9, 3
    %p129 = pnand %p127, %p128
    %p130 = pneg %p129
    // Predicated region
    $region9: #{cosmoflow_conv_block.1} parent=5 // pred_check
      _
    $region10: #{cosmoflow_conv_block.1} parent=5 // pred_check_branch
      %132 = sbr.rel (%p129) target = $region12
    $region11: #{cosmoflow_conv_block.1} parent=5 // pred_region
      %s133 = ssub.s32 %s9, 1
      // Predicated region
      $region13: #{cosmoflow_conv_block.1} parent=11 // pred_check
        %p134 = pneg %p70
      $region14: #{cosmoflow_conv_block.1} parent=11 // pred_check_branch
        %136 = sbr.rel (%p134) target = $region16
      $region15: #{cosmoflow_conv_block.1} parent=11 // pred_region
        _
      $region16: #{cosmoflow_conv_block.1} parent=11 // pred_fallthru
        _
      // Predicated region
      $region17: #{cosmoflow_conv_block.1} parent=11 // pred_check
        %p137 = pneg %p91
      $region18: #{cosmoflow_conv_block.1} parent=11 // pred_check_branch
        %139 = sbr.rel (%p137) target = $region20
      $region19: #{cosmoflow_conv_block.1} parent=11 // pred_region
        _
      $region20: #{cosmoflow_conv_block.1} parent=11 // pred_fallthru
        _
    $region12: #{cosmoflow_conv_block.1} parent=5 // pred_fallthru
      _
    %p140 = scmp.lt.s32.totalorder %s9, 2
    // Predicated region
    $region21: #{cosmoflow_conv_block.1} parent=5 // pred_check
      %p141 = pneg %p140
    $region22: #{cosmoflow_conv_block.1} parent=5 // pred_check_branch
      %143 = sbr.rel (%p141) target = $region24
    $region23: #{cosmoflow_conv_block.1} parent=5 // pred_region
      // Predicated region
      $region25: #{cosmoflow_conv_block.1} parent=23 // pred_check
        %p144 = pneg %p43
      $region26: #{cosmoflow_conv_block.1} parent=23 // pred_check_branch
        %146 = sbr.rel (%p144) target = $region28
      $region27: #{cosmoflow_conv_block.1} parent=23 // pred_region
        %s147 = smul.u32 4, %s17
        %p148 = scmp.lt.s32.totalorder %s16, 1
        %s149 = scalar_select %p148, %s16, 1
        %p150 = scmp.lt.s32.totalorder %s147, 3
        %s151 = scalar_select %p150, %s147, 3
        %s152 = smul.addr %s149, 448
        %s153 = sadd.s32 %s151, %s152
        %s154 = smul.addr %s153, 4
        %s155 = scalar_lea.vmem %s0, %s154
        %s156 = smul.u32 4, %s17
      $region28: #{cosmoflow_conv_block.1} parent=23 // pred_fallthru
        _
    $region24: #{cosmoflow_conv_block.1} parent=5 // pred_fallthru
      _
    %p157 = scmp.le.s32.totalorder 1, %s9
    %p158 = scmp.lt.s32.totalorder %s9, 3
    %p159 = pnand %p157, %p158
    %p160 = pneg %p159
    // Predicated region
    $region29: #{cosmoflow_conv_block.1} parent=5 // pred_check
      _
    $region30: #{cosmoflow_conv_block.1} parent=5 // pred_check_branch
      %162 = sbr.rel (%p159) target = $region32
    $region31: #{cosmoflow_conv_block.1} parent=5 // pred_region
      %s163 = ssub.s32 %s9, 1
      %s164 = smul.u32 4, %s19
      %p165 = scmp.lt.s32.totalorder %s18, 1
      %s166 = scalar_select %p165, %s18, 1
      %p167 = scmp.lt.s32.totalorder %s164, 3
      %s168 = scalar_select %p167, %s164, 3
      %s169 = smul.addr %s166, 448
      %s170 = sadd.s32 %s168, %s169
      %s171 = smul.addr %s170, 4
      %s172 = scalar_lea.vmem %s0, %s171
      %p173 = pneg %p49
      %p174 = pneg %p46
      %p175 = pneg %p70
      %p176 = pneg %p67
      %p177 = pneg %p91
      %p178 = pneg %p88
      %p179 = pneg %p119
      %p180 = pneg %p116
      %s181 = smul.u32 4, %s19
      %p182 = scmp.lt.s32.totalorder %s18, 1
      %s183 = scalar_select %p182, %s18, 1
      %p184 = scmp.lt.s32.totalorder %s181, 3
      %s185 = scalar_select %p184, %s181, 3
      %s186 = smul.addr %s183, 4
      %s187 = sadd.s32 %s185, %s186
      %s188 = smul.addr %s187, 8
      %s189 = scalar_lea.vmem %s3, %s188
      %s190 = smul.u32 4, %s19
      %p191 = scmp.lt.s32.totalorder %s18, 1
      %s192 = scalar_select %p191, %s18, 1
      %p193 = scmp.lt.s32.totalorder %s190, 3
      %s194 = scalar_select %p193, %s190, 3
      %s195 = smul.addr %s192, 448
      %s196 = sadd.s32 %s194, %s195
      %s197 = smul.addr %s196, 4
      %s198 = scalar_lea.vmem %s0, %s197
      %s199 = smul.u32 4, %s19
      %s200 = smul.u32 4, %s19
      %p201 = scmp.lt.s32.totalorder %s18, 1
      %s202 = scalar_select %p201, %s18, 1
      %p203 = scmp.lt.s32.totalorder %s200, 3
      %s204 = scalar_select %p203, %s200, 3
      %s205 = smul.addr %s202, 4
      %s206 = sadd.s32 %s204, %s205
      %s207 = smul.addr %s206, 8
      %s208 = scalar_lea.vmem %s3, %s207
      %s209 = smul.u32 4, %s19
      %v211 = vld [vmem:[%s1] sm:$0xf]
      %v212 = vld [vmem:[%s2] sm:$0xff]
      %v213 = vld [vmem:[%s198] sm:$0xff]
      %v214 = vld [vmem:[%s198 + $0x8] sm:$0xff]
      %v215 = vld [vmem:[%s198 + $0x10] sm:$0xff]
      %v216 = vld [vmem:[%s198 + $0x18] sm:$0xff]
      %v217 = vld [vmem:[%s198 + $0x20] sm:$0xff]
      %v218 = vld [vmem:[%s198 + $0x28] sm:$0xff]
      %v219 = vld [vmem:[%s198 + $0x30] sm:$0xff]
      %v220 = vld [vmem:[%s198 + $0x38] sm:$0xff]
      %v221 = vld [vmem:[%s198 + $0x40] sm:$0xff]
      %v222 = vld [vmem:[%s198 + $0x48] sm:$0xff]
      %v223 = vld [vmem:[%s198 + $0x50] sm:$0xff]
      %v224 = vld [vmem:[%s198 + $0x58] sm:$0xff]
      %v225 = vld [vmem:[%s198 + $0x60] sm:$0xff]
      %v226 = vld [vmem:[%s198 + $0x68] sm:$0xff]
      %v227 = vld [vmem:[%s198 + $0x70] sm:$0xff]
      %v228 = vld [vmem:[%s198 + $0x78] sm:$0xff]
      %v229 = vld [vmem:[%s198 + $0x80] sm:$0xff]
      %v230 = vld [vmem:[%s198 + $0x88] sm:$0xff]
      %v231 = vld [vmem:[%s198 + $0x90] sm:$0xff]
      %v232 = vld [vmem:[%s198 + $0x98] sm:$0xff]
      %v233 = vld [vmem:[%s198 + $0xa0] sm:$0xff]
      %v234 = vld [vmem:[%s198 + $0xa8] sm:$0xff]
      %v235 = vld [vmem:[%s198 + $0xb0] sm:$0xff]
      %v236 = vld [vmem:[%s198 + $0xb8] sm:$0xff]
      %v237 = vld [vmem:[%s198 + $0xc0] sm:$0xff]
      %v238 = vld [vmem:[%s198 + $0xc8] sm:$0xff]
      %v239 = vld [vmem:[%s198 + $0xd0] sm:$0x33]
      %v240 = vld [vmem:[%s198 + $0xd8] sm:$0x33]
      %v269 = vunpack.c.l.b16 %v213
      %v270 = vunpack.c.h.b16 %v213
      %v271 = vunpack.c.l.b16 %v214
      %v272 = vunpack.c.h.b16 %v214
      %v273 = vunpack.c.l.b16 %v215
      %v274 = vunpack.c.h.b16 %v215
      %v275 = vunpack.c.l.b16 %v216
      %v276 = vunpack.c.h.b16 %v216
      %v277 = vunpack.c.l.b16 %v217
      %v278 = vunpack.c.h.b16 %v217
      %v279 = vunpack.c.l.b16 %v218
      %v280 = vunpack.c.h.b16 %v218
      %v281 = vunpack.c.l.b16 %v219
      %v282 = vunpack.c.h.b16 %v219
      %v283 = vunpack.c.l.b16 %v220
      %v284 = vunpack.c.h.b16 %v220
      %v285 = vunpack.c.l.b16 %v221
      %v286 = vunpack.c.h.b16 %v221
      %v287 = vunpack.c.l.b16 %v222
      %v288 = vunpack.c.h.b16 %v222
      %v289 = vunpack.c.l.b16 %v223
      %v290 = vunpack.c.h.b16 %v223
      %v291 = vunpack.c.l.b16 %v224
      %v292 = vunpack.c.h.b16 %v224
      %v293 = vunpack.c.l.b16 %v225
      %v294 = vunpack.c.h.b16 %v225
      %v295 = vunpack.c.l.b16 %v226
      %v296 = vunpack.c.h.b16 %v226
      %v297 = vunpack.c.l.b16 %v227
      %v298 = vunpack.c.h.b16 %v227
      %v299 = vunpack.c.l.b16 %v228
      %v300 = vunpack.c.h.b16 %v228
      %v301 = vunpack.c.l.b16 %v229
      %v302 = vunpack.c.h.b16 %v229
      %v303 = vunpack.c.l.b16 %v230
      %v304 = vunpack.c.h.b16 %v230
      %v305 = vunpack.c.l.b16 %v231
      %v306 = vunpack.c.h.b16 %v231
      %v307 = vunpack.c.l.b16 %v232
      %v308 = vunpack.c.h.b16 %v232
      %v309 = vunpack.c.l.b16 %v233
      %v310 = vunpack.c.h.b16 %v233
      %v311 = vunpack.c.l.b16 %v234
      %v312 = vunpack.c.h.b16 %v234
      %v313 = vunpack.c.l.b16 %v235
      %v314 = vunpack.c.h.b16 %v235
      %v315 = vunpack.c.l.b16 %v236
      %v316 = vunpack.c.h.b16 %v236
      %v317 = vunpack.c.l.b16 %v237
      %v318 = vunpack.c.h.b16 %v237
      %v319 = vunpack.c.l.b16 %v238
      %v320 = vunpack.c.h.b16 %v238
      %v321 = vunpack.c.l.b16 %v239
      %v322 = vunpack.c.h.b16 %v239
      %v323 = vunpack.c.l.b16 %v240
      %v324 = vunpack.c.h.b16 %v240
      %v325 = vpack.c.b16 %v273, %v269
      %v326 = vpack.c.b16 %v274, %v270
      %v327 = vpack.c.b16 %v275, %v271
      %v328 = vpack.c.b16 %v276, %v272
      %v329 = vpack.c.b16 %v281, %v277
      %v330 = vpack.c.b16 %v282, %v278
      %v331 = vpack.c.b16 %v283, %v279
      %v332 = vpack.c.b16 %v284, %v280
      %v333 = vpack.c.b16 %v289, %v285
      %v334 = vpack.c.b16 %v290, %v286
      %v335 = vpack.c.b16 %v291, %v287
      %v336 = vpack.c.b16 %v292, %v288
      %v337 = vpack.c.b16 %v297, %v293
      %v338 = vpack.c.b16 %v298, %v294
      %v339 = vpack.c.b16 %v299, %v295
      %v340 = vpack.c.b16 %v300, %v296
      %v341 = vpack.c.b16 %v305, %v301
      %v342 = vpack.c.b16 %v306, %v302
      %v343 = vpack.c.b16 %v307, %v303
      %v344 = vpack.c.b16 %v308, %v304
      %v345 = vpack.c.b16 %v313, %v309
      %v346 = vpack.c.b16 %v314, %v310
      %v347 = vpack.c.b16 %v315, %v311
      %v348 = vpack.c.b16 %v316, %v312
      %v349 = vpack.c.b16 %v321, %v317
      %v350 = vpack.c.b16 %v322, %v318
      %v351 = vpack.c.b16 %v323, %v319
      %v352 = vpack.c.b16 %v324, %v320
      %vm377 = vcmask 883712
      %v379 = vsel %vm377, %v211, 0
      %vm381 = vcmask 1045504
      %v383 = vsel %vm381, %v349, 0
      %v386 = vsel %vm381, %v350, 0
      %v389 = vsel %vm381, %v351, 0
      %v392 = vsel %vm381, %v352, 0
      %394 = vmatprep.subr.bf16.mxu0 %v326
      %395 = vmatpush1.bf16.msra.mxu0 %v325
      %396 = vmatprep.subr.bf16.mxu0 %v330
      %397 = vmatpush1.bf16.msra.mxu0 %v329
      %398 = vmatprep.subr.bf16.mxu0 %v334
      %399 = vmatpush1.bf16.msra.mxu0 %v333
      %400 = vmatprep.subr.bf16.mxu0 %v338
      %401 = vmatpush1.bf16.msra.mxu0 %v337
      %402 = vmatprep.subr.bf16.mxu0 %v342
      %403 = vmatpush1.bf16.msra.mxu0 %v341
      %404 = vmatprep.subr.bf16.mxu0 %v346
      %405 = vmatpush1.bf16.msra.mxu0 %v345
      %406 = vmatprep.subr.bf16.mxu0 %v386
      %407 = vmatpush1.bf16.msra.mxu0 %v383
      %408 = vmatprep.subr.bf16.mxu0 0
      %409 = vmatpush1.bf16.msra.mxu0 0
      %410 = vmatprep.subr.bf16.mxu0 0
      %411 = vmatpush1.bf16.msra.mxu0 0
      %412 = vmatprep.subr.bf16.mxu0 0
      %413 = vmatpush1.bf16.msra.mxu0 0
      %414 = vmatprep.subr.bf16.mxu0 0
      %415 = vmatpush1.bf16.msra.mxu0 0
      %416 = vmatprep.subr.bf16.mxu0 0
      %417 = vmatpush1.bf16.msra.mxu0 0
      %418 = vmatprep.subr.bf16.mxu0 0
      %419 = vmatpush1.bf16.msra.mxu0 0
      %420 = vmatprep.subr.bf16.mxu0 0
      %421 = vmatpush1.bf16.msra.mxu0 0
      %422 = vmatprep.subr.bf16.mxu0 0
      %423 = vmatpush1.bf16.msra.mxu0 0
      %424 = vmatprep.subr.bf16.mxu0 0
      %425 = vmatpush1.bf16.msra.mxu0 0
      %426 = vmatprep.mubr.bf16.mxu0 0
      %427 = vmatmul.mubr.bf16.gmra.mrb[0].mxu0 %v379
      %v428 = vpop.f32.mrb[0].mxu0
      %v429 = vadd.f32 0.0, %v428
      %v430 = vpop.f32.mrb[0].mxu0
      %v431 = vadd.f32 0.0, %v430
      %v432 = vpop.f32.mrb[0].mxu0
      %v433 = vpop.f32.mrb[0].mxu0
      %434 = vdwg.mxu0
      %435 = vmatprep.subr.bf16.mxu0 %v328
      %436 = vmatpush1.bf16.msra.mxu0 %v327
      %437 = vmatprep.subr.bf16.mxu0 %v332
      %438 = vmatpush1.bf16.msra.mxu0 %v331
      %439 = vmatprep.subr.bf16.mxu0 %v336
      %440 = vmatpush1.bf16.msra.mxu0 %v335
      %441 = vmatprep.subr.bf16.mxu0 %v340
      %442 = vmatpush1.bf16.msra.mxu0 %v339
      %443 = vmatprep.subr.bf16.mxu0 %v344
      %444 = vmatpush1.bf16.msra.mxu0 %v343
      %445 = vmatprep.subr.bf16.mxu0 %v348
      %446 = vmatpush1.bf16.msra.mxu0 %v347
      %447 = vmatprep.subr.bf16.mxu0 %v392
      %448 = vmatpush1.bf16.msra.mxu0 %v389
      %449 = vmatprep.subr.bf16.mxu0 0
      %450 = vmatpush1.bf16.msra.mxu0 0
      %451 = vmatprep.subr.bf16.mxu0 0
      %452 = vmatpush1.bf16.msra.mxu0 0
      %453 = vmatprep.subr.bf16.mxu0 0
      %454 = vmatpush1.bf16.msra.mxu0 0
      %455 = vmatprep.subr.bf16.mxu0 0
      %456 = vmatpush1.bf16.msra.mxu0 0
      %457 = vmatprep.subr.bf16.mxu0 0
      %458 = vmatpush1.bf16.msra.mxu0 0
      %459 = vmatprep.subr.bf16.mxu0 0
      %460 = vmatpush1.bf16.msra.mxu0 0
      %461 = vmatprep.subr.bf16.mxu0 0
      %462 = vmatpush1.bf16.msra.mxu0 0
      %463 = vmatprep.subr.bf16.mxu0 0
      %464 = vmatpush1.bf16.msra.mxu0 0
      %465 = vmatprep.subr.bf16.mxu0 0
      %466 = vmatpush1.bf16.msra.mxu0 0
      %467 = vmatprep.mubr.bf16.mxu0 0
      %468 = vmatmul.mubr.bf16.gmra.mrb[0].mxu0 %v379
      %v469 = vpop.f32.mrb[0].mxu0
      %v470 = vadd.f32 0.0, %v469
      %v471 = vpop.f32.mrb[0].mxu0
      %v472 = vadd.f32 0.0, %v471
      %v473 = vpop.f32.mrb[0].mxu0
      %v474 = vpop.f32.mrb[0].mxu0
      %475 = vdwg.mxu0
      %s476 = scalar_lea.vmem %s198, 224
      %v477 = vld [vmem:[%s476] sm:$0xff]
      %v478 = vld [vmem:[%s476 + $0x8] sm:$0xff]
      %v479 = vld [vmem:[%s476 + $0x10] sm:$0xff]
      %v480 = vld [vmem:[%s476 + $0x18] sm:$0xff]
      %v481 = vld [vmem:[%s476 + $0x20] sm:$0xff]
      %v482 = vld [vmem:[%s476 + $0x28] sm:$0xff]
      %v483 = vld [vmem:[%s476 + $0x30] sm:$0xff]
      %v484 = vld [vmem:[%s476 + $0x38] sm:$0xff]
      %v485 = vld [vmem:[%s476 + $0x40] sm:$0xff]
      %v486 = vld [vmem:[%s476 + $0x48] sm:$0xff]
      %v487 = vld [vmem:[%s476 + $0x50] sm:$0xff]
      %v488 = vld [vmem:[%s476 + $0x58] sm:$0xff]
      %v489 = vld [vmem:[%s476 + $0x60] sm:$0xff]
      %v490 = vld [vmem:[%s476 + $0x68] sm:$0xff]
      %v491 = vld [vmem:[%s476 + $0x70] sm:$0xff]
      %v492 = vld [vmem:[%s476 + $0x78] sm:$0xff]
      %v493 = vld [vmem:[%s476 + $0x80] sm:$0xff]
      %v494 = vld [vmem:[%s476 + $0x88] sm:$0xff]
      %v495 = vld [vmem:[%s476 + $0x90] sm:$0xff]
      %v496 = vld [vmem:[%s476 + $0x98] sm:$0xff]
      %v497 = vld [vmem:[%s476 + $0xa0] sm:$0xff]
      %v498 = vld [vmem:[%s476 + $0xa8] sm:$0xff]
      %v499 = vld [vmem:[%s476 + $0xb0] sm:$0xff]
      %v500 = vld [vmem:[%s476 + $0xb8] sm:$0xff]
      %v501 = vld [vmem:[%s476 + $0xc0] sm:$0xff]
      %v502 = vld [vmem:[%s476 + $0xc8] sm:$0xff]
      %v503 = vld [vmem:[%s476 + $0xd0] sm:$0x33]
      %v504 = vld [vmem:[%s476 + $0xd8] sm:$0x33]
      %v533 = vunpack.c.l.b16 %v477
      %v534 = vunpack.c.h.b16 %v477
      %v535 = vunpack.c.l.b16 %v478
      %v536 = vunpack.c.h.b16 %v478
      %v537 = vunpack.c.l.b16 %v479
      %v538 = vunpack.c.h.b16 %v479
      %v539 = vunpack.c.l.b16 %v480
      %v540 = vunpack.c.h.b16 %v480
      %v541 = vunpack.c.l.b16 %v481
      %v542 = vunpack.c.h.b16 %v481
      %v543 = vunpack.c.l.b16 %v482
      %v544 = vunpack.c.h.b16 %v482
      %v545 = vunpack.c.l.b16 %v483
      %v546 = vunpack.c.h.b16 %v483
      %v547 = vunpack.c.l.b16 %v484
      %v548 = vunpack.c.h.b16 %v484
      %v549 = vunpack.c.l.b16 %v485
      %v550 = vunpack.c.h.b16 %v485
      %v551 = vunpack.c.l.b16 %v486
      %v552 = vunpack.c.h.b16 %v486
      %v553 = vunpack.c.l.b16 %v487
      %v554 = vunpack.c.h.b16 %v487
      %v555 = vunpack.c.l.b16 %v488
      %v556 = vunpack.c.h.b16 %v488
      %v557 = vunpack.c.l.b16 %v489
      %v558 = vunpack.c.h.b16 %v489
      %v559 = vunpack.c.l.b16 %v490
      %v560 = vunpack.c.h.b16 %v490
      %v561 = vunpack.c.l.b16 %v491
      %v562 = vunpack.c.h.b16 %v491
      %v563 = vunpack.c.l.b16 %v492
      %v564 = vunpack.c.h.b16 %v492
      %v565 = vunpack.c.l.b16 %v493
      %v566 = vunpack.c.h.b16 %v493
      %v567 = vunpack.c.l.b16 %v494
      %v568 = vunpack.c.h.b16 %v494
      %v569 = vunpack.c.l.b16 %v495
      %v570 = vunpack.c.h.b16 %v495
      %v571 = vunpack.c.l.b16 %v496
      %v572 = vunpack.c.h.b16 %v496
      %v573 = vunpack.c.l.b16 %v497
      %v574 = vunpack.c.h.b16 %v497
      %v575 = vunpack.c.l.b16 %v498
      %v576 = vunpack.c.h.b16 %v498
      %v577 = vunpack.c.l.b16 %v499
      %v578 = vunpack.c.h.b16 %v499
      %v579 = vunpack.c.l.b16 %v500
      %v580 = vunpack.c.h.b16 %v500
      %v581 = vunpack.c.l.b16 %v501
      %v582 = vunpack.c.h.b16 %v501
      %v583 = vunpack.c.l.b16 %v502
      %v584 = vunpack.c.h.b16 %v502
      %v585 = vunpack.c.l.b16 %v503
      %v586 = vunpack.c.h.b16 %v503
      %v587 = vunpack.c.l.b16 %v504
      %v588 = vunpack.c.h.b16 %v504
      %v589 = vpack.c.b16 %v537, %v533
      %v590 = vpack.c.b16 %v538, %v534
      %v591 = vpack.c.b16 %v539, %v535
      %v592 = vpack.c.b16 %v540, %v536
      %v593 = vpack.c.b16 %v545, %v541
      %v594 = vpack.c.b16 %v546, %v542
      %v595 = vpack.c.b16 %v547, %v543
      %v596 = vpack.c.b16 %v548, %v544
      %v597 = vpack.c.b16 %v553, %v549
      %v598 = vpack.c.b16 %v554, %v550
      %v599 = vpack.c.b16 %v555, %v551
      %v600 = vpack.c.b16 %v556, %v552
      %v601 = vpack.c.b16 %v561, %v557
      %v602 = vpack.c.b16 %v562, %v558
      %v603 = vpack.c.b16 %v563, %v559
      %v604 = vpack.c.b16 %v564, %v560
      %v605 = vpack.c.b16 %v569, %v565
      %v606 = vpack.c.b16 %v570, %v566
      %v607 = vpack.c.b16 %v571, %v567
      %v608 = vpack.c.b16 %v572, %v568
      %v609 = vpack.c.b16 %v577, %v573
      %v610 = vpack.c.b16 %v578, %v574
      %v611 = vpack.c.b16 %v579, %v575
      %v612 = vpack.c.b16 %v580, %v576
      %v613 = vpack.c.b16 %v585, %v581
      %v614 = vpack.c.b16 %v586, %v582
      %v615 = vpack.c.b16 %v587, %v583
      %v616 = vpack.c.b16 %v588, %v584
      %v642 = vsel %vm381, %v613, 0
      %v645 = vsel %vm381, %v614, 0
      %v648 = vsel %vm381, %v615, 0
      %v651 = vsel %vm381, %v616, 0
      %653 = vmatprep.subr.bf16.mxu0 %v590
      %654 = vmatpush1.bf16.msra.mxu0 %v589
      %655 = vmatprep.subr.bf16.mxu0 %v594
      %656 = vmatpush1.bf16.msra.mxu0 %v593
      %657 = vmatprep.subr.bf16.mxu0 %v598
      %658 = vmatpush1.bf16.msra.mxu0 %v597
      %659 = vmatprep.subr.bf16.mxu0 %v602
      %660 = vmatpush1.bf16.msra.mxu0 %v601
      %661 = vmatprep.subr.bf16.mxu0 %v606
      %662 = vmatpush1.bf16.msra.mxu0 %v605
      %663 = vmatprep.subr.bf16.mxu0 %v610
      %664 = vmatpush1.bf16.msra.mxu0 %v609
      %665 = vmatprep.subr.bf16.mxu0 %v645
      %666 = vmatpush1.bf16.msra.mxu0 %v642
      %667 = vmatprep.subr.bf16.mxu0 0
      %668 = vmatpush1.bf16.msra.mxu0 0
      %669 = vmatprep.subr.bf16.mxu0 0
      %670 = vmatpush1.bf16.msra.mxu0 0
      %671 = vmatprep.subr.bf16.mxu0 0
      %672 = vmatpush1.bf16.msra.mxu0 0
      %673 = vmatprep.subr.bf16.mxu0 0
      %674 = vmatpush1.bf16.msra.mxu0 0
      %675 = vmatprep.subr.bf16.mxu0 0
      %676 = vmatpush1.bf16.msra.mxu0 0
      %677 = vmatprep.subr.bf16.mxu0 0
      %678 = vmatpush1.bf16.msra.mxu0 0
      %679 = vmatprep.subr.bf16.mxu0 0
      %680 = vmatpush1.bf16.msra.mxu0 0
      %681 = vmatprep.subr.bf16.mxu0 0
      %682 = vmatpush1.bf16.msra.mxu0 0
      %683 = vmatprep.subr.bf16.mxu0 0
      %684 = vmatpush1.bf16.msra.mxu0 0
      %685 = vmatprep.mubr.bf16.mxu0 0
      %686 = vmatmul.mubr.bf16.gmra.mrb[0].mxu0 %v379
      %v687 = vpop.f32.mrb[0].mxu0
      %v688 = vadd.f32 0.0, %v687
      %v689 = vpop.f32.mrb[0].mxu0
      %v690 = vadd.f32 0.0, %v689
      %v691 = vpop.f32.mrb[0].mxu0
      %v692 = vpop.f32.mrb[0].mxu0
      %693 = vdwg.mxu0
      %694 = vmatprep.subr.bf16.mxu0 %v592
      %695 = vmatpush1.bf16.msra.mxu0 %v591
      %696 = vmatprep.subr.bf16.mxu0 %v596
      %697 = vmatpush1.bf16.msra.mxu0 %v595
      %698 = vmatprep.subr.bf16.mxu0 %v600
      %699 = vmatpush1.bf16.msra.mxu0 %v599
      %700 = vmatprep.subr.bf16.mxu0 %v604
      %701 = vmatpush1.bf16.msra.mxu0 %v603
      %702 = vmatprep.subr.bf16.mxu0 %v608
      %703 = vmatpush1.bf16.msra.mxu0 %v607
      %704 = vmatprep.subr.bf16.mxu0 %v612
      %705 = vmatpush1.bf16.msra.mxu0 %v611
      %706 = vmatprep.subr.bf16.mxu0 %v651
      %707 = vmatpush1.bf16.msra.mxu0 %v648
      %708 = vmatprep.subr.bf16.mxu0 0
      %709 = vmatpush1.bf16.msra.mxu0 0
      %710 = vmatprep.subr.bf16.mxu0 0
      %711 = vmatpush1.bf16.msra.mxu0 0
      %712 = vmatprep.subr.bf16.mxu0 0
      %713 = vmatpush1.bf16.msra.mxu0 0
      %714 = vmatprep.subr.bf16.mxu0 0
      %715 = vmatpush1.bf16.msra.mxu0 0
      %716 = vmatprep.subr.bf16.mxu0 0
      %717 = vmatpush1.bf16.msra.mxu0 0
      %718 = vmatprep.subr.bf16.mxu0 0
      %719 = vmatpush1.bf16.msra.mxu0 0
      %720 = vmatprep.subr.bf16.mxu0 0
      %721 = vmatpush1.bf16.msra.mxu0 0
      %722 = vmatprep.subr.bf16.mxu0 0
      %723 = vmatpush1.bf16.msra.mxu0 0
      %724 = vmatprep.subr.bf16.mxu0 0
      %725 = vmatpush1.bf16.msra.mxu0 0
      %726 = vmatprep.mubr.bf16.mxu0 0
      %727 = vmatmul.mubr.bf16.gmra.mrb[0].mxu0 %v379
      %v728 = vpop.f32.mrb[0].mxu0
      %v729 = vadd.f32 0.0, %v728
      %v730 = vpop.f32.mrb[0].mxu0
      %v731 = vadd.f32 0.0, %v730
      %v732 = vpop.f32.mrb[0].mxu0
      %v733 = vpop.f32.mrb[0].mxu0
      %734 = vdwg.mxu0
      %v735 = vmax.f32 %v429, %v688
      %v736 = vmax.f32 %v431, %v690
      %v737 = vmax.f32 %v470, %v729
      %v738 = vmax.f32 %v472, %v731
      %s739 = scalar_lea.vmem %s198, 448
      %v740 = vld [vmem:[%s739] sm:$0xff]
      %v741 = vld [vmem:[%s739 + $0x8] sm:$0xff]
      %v742 = vld [vmem:[%s739 + $0x10] sm:$0xff]
      %v743 = vld [vmem:[%s739 + $0x18] sm:$0xff]
      %v744 = vld [vmem:[%s739 + $0x20] sm:$0xff]
      %v745 = vld [vmem:[%s739 + $0x28] sm:$0xff]
      %v746 = vld [vmem:[%s739 + $0x30] sm:$0xff]
      %v747 = vld [vmem:[%s739 + $0x38] sm:$0xff]
      %v748 = vld [vmem:[%s739 + $0x40] sm:$0xff]
      %v749 = vld [vmem:[%s739 + $0x48] sm:$0xff]
      %v750 = vld [vmem:[%s739 + $0x50] sm:$0xff]
      %v751 = vld [vmem:[%s739 + $0x58] sm:$0xff]
      %v752 = vld [vmem:[%s739 + $0x60] sm:$0xff]
      %v753 = vld [vmem:[%s739 + $0x68] sm:$0xff]
      %v754 = vld [vmem:[%s739 + $0x70] sm:$0xff]
      %v755 = vld [vmem:[%s739 + $0x78] sm:$0xff]
      %v756 = vld [vmem:[%s739 + $0x80] sm:$0xff]
      %v757 = vld [vmem:[%s739 + $0x88] sm:$0xff]
      %v758 = vld [vmem:[%s739 + $0x90] sm:$0xff]
      %v759 = vld [vmem:[%s739 + $0x98] sm:$0xff]
      %v760 = vld [vmem:[%s739 + $0xa0] sm:$0xff]
      %v761 = vld [vmem:[%s739 + $0xa8] sm:$0xff]
      %v762 = vld [vmem:[%s739 + $0xb0] sm:$0xff]
      %v763 = vld [vmem:[%s739 + $0xb8] sm:$0xff]
      %v764 = vld [vmem:[%s739 + $0xc0] sm:$0xff]
      %v765 = vld [vmem:[%s739 + $0xc8] sm:$0xff]
      %v766 = vld [vmem:[%s739 + $0xd0] sm:$0x33]
      %v767 = vld [vmem:[%s739 + $0xd8] sm:$0x33]
      %v796 = vunpack.c.l.b16 %v740
      %v797 = vunpack.c.h.b16 %v740
      %v798 = vunpack.c.l.b16 %v741
      %v799 = vunpack.c.h.b16 %v741
      %v800 = vunpack.c.l.b16 %v742
      %v801 = vunpack.c.h.b16 %v742
      %v802 = vunpack.c.l.b16 %v743
      %v803 = vunpack.c.h.b16 %v743
      %v804 = vunpack.c.l.b16 %v744
      %v805 = vunpack.c.h.b16 %v744
      %v806 = vunpack.c.l.b16 %v745
      %v807 = vunpack.c.h.b16 %v745
      %v808 = vunpack.c.l.b16 %v746
      %v809 = vunpack.c.h.b16 %v746
      %v810 = vunpack.c.l.b16 %v747
      %v811 = vunpack.c.h.b16 %v747
      %v812 = vunpack.c.l.b16 %v748
      %v813 = vunpack.c.h.b16 %v748
      %v814 = vunpack.c.l.b16 %v749
      %v815 = vunpack.c.h.b16 %v749
      %v816 = vunpack.c.l.b16 %v750
      %v817 = vunpack.c.h.b16 %v750
      %v818 = vunpack.c.l.b16 %v751
      %v819 = vunpack.c.h.b16 %v751
      %v820 = vunpack.c.l.b16 %v752
      %v821 = vunpack.c.h.b16 %v752
      %v822 = vunpack.c.l.b16 %v753
      %v823 = vunpack.c.h.b16 %v753
      %v824 = vunpack.c.l.b16 %v754
      %v825 = vunpack.c.h.b16 %v754
      %v826 = vunpack.c.l.b16 %v755
      %v827 = vunpack.c.h.b16 %v755
      %v828 = vunpack.c.l.b16 %v756
      %v829 = vunpack.c.h.b16 %v756
      %v830 = vunpack.c.l.b16 %v757
      %v831 = vunpack.c.h.b16 %v757
      %v832 = vunpack.c.l.b16 %v758
      %v833 = vunpack.c.h.b16 %v758
      %v834 = vunpack.c.l.b16 %v759
      %v835 = vunpack.c.h.b16 %v759
      %v836 = vunpack.c.l.b16 %v760
      %v837 = vunpack.c.h.b16 %v760
      %v838 = vunpack.c.l.b16 %v761
      %v839 = vunpack.c.h.b16 %v761
      %v840 = vunpack.c.l.b16 %v762
      %v841 = vunpack.c.h.b16 %v762
      %v842 = vunpack.c.l.b16 %v763
      %v843 = vunpack.c.h.b16 %v763
      %v844 = vunpack.c.l.b16 %v764
      %v845 = vunpack.c.h.b16 %v764
      %v846 = vunpack.c.l.b16 %v765
      %v847 = vunpack.c.h.b16 %v765
      %v848 = vunpack.c.l.b16 %v766
      %v849 = vunpack.c.h.b16 %v766
      %v850 = vunpack.c.l.b16 %v767
      %v851 = vunpack.c.h.b16 %v767
      %v852 = vpack.c.b16 %v800, %v796
      %v853 = vpack.c.b16 %v801, %v797
      %v854 = vpack.c.b16 %v802, %v798
      %v855 = vpack.c.b16 %v803, %v799
      %v856 = vpack.c.b16 %v808, %v804
      %v857 = vpack.c.b16 %v809, %v805
      %v858 = vpack.c.b16 %v810, %v806
      %v859 = vpack.c.b16 %v811, %v807
      %v860 = vpack.c.b16 %v816, %v812
      %v861 = vpack.c.b16 %v817, %v813
      %v862 = vpack.c.b16 %v818, %v814
      %v863 = vpack.c.b16 %v819, %v815
      %v864 = vpack.c.b16 %v824, %v820
      %v865 = vpack.c.b16 %v825, %v821
      %v866 = vpack.c.b16 %v826, %v822
      %v867 = vpack.c.b16 %v827, %v823
      %v868 = vpack.c.b16 %v832, %v828
      %v869 = vpack.c.b16 %v833, %v829
      %v870 = vpack.c.b16 %v834, %v830
      %v871 = vpack.c.b16 %v835, %v831
      %v872 = vpack.c.b16 %v840, %v836
      %v873 = vpack.c.b16 %v841, %v837
      %v874 = vpack.c.b16 %v842, %v838
      %v875 = vpack.c.b16 %v843, %v839
      %v876 = vpack.c.b16 %v848, %v844
      %v877 = vpack.c.b16 %v849, %v845
      %v878 = vpack.c.b16 %v850, %v846
      %v879 = vpack.c.b16 %v851, %v847
      %v905 = vsel %vm381, %v876, 0
      %v908 = vsel %vm381, %v877, 0
      %v911 = vsel %vm381, %v878, 0
      %v914 = vsel %vm381, %v879, 0
      %916 = vmatprep.subr.bf16.mxu0 %v853
      %917 = vmatpush1.bf16.msra.mxu0 %v852
      %918 = vmatprep.subr.bf16.mxu0 %v857
      %919 = vmatpush1.bf16.msra.mxu0 %v856
      %920 = vmatprep.subr.bf16.mxu0 %v861
      %921 = vmatpush1.bf16.msra.mxu0 %v860
      %922 = vmatprep.subr.bf16.mxu0 %v865
      %923 = vmatpush1.bf16.msra.mxu0 %v864
      %924 = vmatprep.subr.bf16.mxu0 %v869
      %925 = vmatpush1.bf16.msra.mxu0 %v868
      %926 = vmatprep.subr.bf16.mxu0 %v873
      %927 = vmatpush1.bf16.msra.mxu0 %v872
      %928 = vmatprep.subr.bf16.mxu0 %v908
      %929 = vmatpush1.bf16.msra.mxu0 %v905
      %930 = vmatprep.subr.bf16.mxu0 0
      %931 = vmatpush1.bf16.msra.mxu0 0
      %932 = vmatprep.subr.bf16.mxu0 0
      %933 = vmatpush1.bf16.msra.mxu0 0
      %934 = vmatprep.subr.bf16.mxu0 0
      %935 = vmatpush1.bf16.msra.mxu0 0
      %936 = vmatprep.subr.bf16.mxu0 0
      %937 = vmatpush1.bf16.msra.mxu0 0
      %938 = vmatprep.subr.bf16.mxu0 0
      %939 = vmatpush1.bf16.msra.mxu0 0
      %940 = vmatprep.subr.bf16.mxu0 0
      %941 = vmatpush1.bf16.msra.mxu0 0
      %942 = vmatprep.subr.bf16.mxu0 0
      %943 = vmatpush1.bf16.msra.mxu0 0
      %944 = vmatprep.subr.bf16.mxu0 0
      %945 = vmatpush1.bf16.msra.mxu0 0
      %946 = vmatprep.subr.bf16.mxu0 0
      %947 = vmatpush1.bf16.msra.mxu0 0
      %948 = vmatprep.mubr.bf16.mxu0 0
      %949 = vmatmul.mubr.bf16.gmra.mrb[0].mxu0 %v379
      %v950 = vpop.f32.mrb[0].mxu0
      %v951 = vadd.f32 0.0, %v950
      %v952 = vpop.f32.mrb[0].mxu0
      %v953 = vadd.f32 0.0, %v952
      %v954 = vpop.f32.mrb[0].mxu0
      %v955 = vpop.f32.mrb[0].mxu0
      %956 = vdwg.mxu0
      %957 = vmatprep.subr.bf16.mxu0 %v855
      %958 = vmatpush1.bf16.msra.mxu0 %v854
      %959 = vmatprep.subr.bf16.mxu0 %v859
      %960 = vmatpush1.bf16.msra.mxu0 %v858
      %961 = vmatprep.subr.bf16.mxu0 %v863
      %962 = vmatpush1.bf16.msra.mxu0 %v862
      %963 = vmatprep.subr.bf16.mxu0 %v867
      %964 = vmatpush1.bf16.msra.mxu0 %v866
      %965 = vmatprep.subr.bf16.mxu0 %v871
      %966 = vmatpush1.bf16.msra.mxu0 %v870
      %967 = vmatprep.subr.bf16.mxu0 %v875
      %968 = vmatpush1.bf16.msra.mxu0 %v874
      %969 = vmatprep.subr.bf16.mxu0 %v914
      %970 = vmatpush1.bf16.msra.mxu0 %v911
      %971 = vmatprep.subr.bf16.mxu0 0
      %972 = vmatpush1.bf16.msra.mxu0 0
      %973 = vmatprep.subr.bf16.mxu0 0
      %974 = vmatpush1.bf16.msra.mxu0 0
      %975 = vmatprep.subr.bf16.mxu0 0
      %976 = vmatpush1.bf16.msra.mxu0 0
      %977 = vmatprep.subr.bf16.mxu0 0
      %978 = vmatpush1.bf16.msra.mxu0 0
      %979 = vmatprep.subr.bf16.mxu0 0
      %980 = vmatpush1.bf16.msra.mxu0 0
      %981 = vmatprep.subr.bf16.mxu0 0
      %982 = vmatpush1.bf16.msra.mxu0 0
      %983 = vmatprep.subr.bf16.mxu0 0
      %984 = vmatpush1.bf16.msra.mxu0 0
      %985 = vmatprep.subr.bf16.mxu0 0
      %986 = vmatpush1.bf16.msra.mxu0 0
      %987 = vmatprep.subr.bf16.mxu0 0
      %988 = vmatpush1.bf16.msra.mxu0 0
      %989 = vmatprep.mubr.bf16.mxu0 0
      %990 = vmatmul.mubr.bf16.gmra.mrb[0].mxu0 %v379
      %v991 = vpop.f32.mrb[0].mxu0
      %v992 = vadd.f32 0.0, %v991
      %v993 = vpop.f32.mrb[0].mxu0
      %v994 = vadd.f32 0.0, %v993
      %v995 = vpop.f32.mrb[0].mxu0
      %v996 = vpop.f32.mrb[0].mxu0
      %997 = vdwg.mxu0
      %v998 = vmax.f32 %v735, %v951
      %v999 = vmax.f32 %v736, %v953
      %v1000 = vmax.f32 %v737, %v992
      %v1001 = vmax.f32 %v738, %v994
      %s1002 = scalar_lea.vmem %s198, 672
      %v1003 = vld [vmem:[%s1002] sm:$0xff]
      %v1004 = vld [vmem:[%s1002 + $0x8] sm:$0xff]
      %v1005 = vld [vmem:[%s1002 + $0x10] sm:$0xff]
      %v1006 = vld [vmem:[%s1002 + $0x18] sm:$0xff]
      %v1007 = vld [vmem:[%s1002 + $0x20] sm:$0xff]
      %v1008 = vld [vmem:[%s1002 + $0x28] sm:$0xff]
      %v1009 = vld [vmem:[%s1002 + $0x30] sm:$0xff]
      %v1010 = vld [vmem:[%s1002 + $0x38] sm:$0xff]
      %v1011 = vld [vmem:[%s1002 + $0x40] sm:$0xff]
      %v1012 = vld [vmem:[%s1002 + $0x48] sm:$0xff]
      %v1013 = vld [vmem:[%s1002 + $0x50] sm:$0xff]
      %v1014 = vld [vmem:[%s1002 + $0x58] sm:$0xff]
      %v1015 = vld [vmem:[%s1002 + $0x60] sm:$0xff]
      %v1016 = vld [vmem:[%s1002 + $0x68] sm:$0xff]
      %v1017 = vld [vmem:[%s1002 + $0x70] sm:$0xff]
      %v1018 = vld [vmem:[%s1002 + $0x78] sm:$0xff]
      %v1019 = vld [vmem:[%s1002 + $0x80] sm:$0xff]
      %v1020 = vld [vmem:[%s1002 + $0x88] sm:$0xff]
      %v1021 = vld [vmem:[%s1002 + $0x90] sm:$0xff]
      %v1022 = vld [vmem:[%s1002 + $0x98] sm:$0xff]
      %v1023 = vld [vmem:[%s1002 + $0xa0] sm:$0xff]
      %v1024 = vld [vmem:[%s1002 + $0xa8] sm:$0xff]
      %v1025 = vld [vmem:[%s1002 + $0xb0] sm:$0xff]
      %v1026 = vld [vmem:[%s1002 + $0xb8] sm:$0xff]
      %v1027 = vld [vmem:[%s1002 + $0xc0] sm:$0xff]
      %v1028 = vld [vmem:[%s1002 + $0xc8] sm:$0xff]
      %v1029 = vld [vmem:[%s1002 + $0xd0] sm:$0x33]
      %v1030 = vld [vmem:[%s1002 + $0xd8] sm:$0x33]
      %v1059 = vunpack.c.l.b16 %v1003
      %v1060 = vunpack.c.h.b16 %v1003
      %v1061 = vunpack.c.l.b16 %v1004
      %v1062 = vunpack.c.h.b16 %v1004
      %v1063 = vunpack.c.l.b16 %v1005
      %v1064 = vunpack.c.h.b16 %v1005
      %v1065 = vunpack.c.l.b16 %v1006
      %v1066 = vunpack.c.h.b16 %v1006
      %v1067 = vunpack.c.l.b16 %v1007
      %v1068 = vunpack.c.h.b16 %v1007
      %v1069 = vunpack.c.l.b16 %v1008
      %v1070 = vunpack.c.h.b16 %v1008
      %v1071 = vunpack.c.l.b16 %v1009
      %v1072 = vunpack.c.h.b16 %v1009
      %v1073 = vunpack.c.l.b16 %v1010
      %v1074 = vunpack.c.h.b16 %v1010
      %v1075 = vunpack.c.l.b16 %v1011
      %v1076 = vunpack.c.h.b16 %v1011
      %v1077 = vunpack.c.l.b16 %v1012
      %v1078 = vunpack.c.h.b16 %v1012
      %v1079 = vunpack.c.l.b16 %v1013
      %v1080 = vunpack.c.h.b16 %v1013
      %v1081 = vunpack.c.l.b16 %v1014
      %v1082 = vunpack.c.h.b16 %v1014
      %v1083 = vunpack.c.l.b16 %v1015
      %v1084 = vunpack.c.h.b16 %v1015
      %v1085 = vunpack.c.l.b16 %v1016
      %v1086 = vunpack.c.h.b16 %v1016
      %v1087 = vunpack.c.l.b16 %v1017
      %v1088 = vunpack.c.h.b16 %v1017
      %v1089 = vunpack.c.l.b16 %v1018
      %v1090 = vunpack.c.h.b16 %v1018
      %v1091 = vunpack.c.l.b16 %v1019
      %v1092 = vunpack.c.h.b16 %v1019
      %v1093 = vunpack.c.l.b16 %v1020
      %v1094 = vunpack.c.h.b16 %v1020
      %v1095 = vunpack.c.l.b16 %v1021
      %v1096 = vunpack.c.h.b16 %v1021
      %v1097 = vunpack.c.l.b16 %v1022
      %v1098 = vunpack.c.h.b16 %v1022
      %v1099 = vunpack.c.l.b16 %v1023
      %v1100 = vunpack.c.h.b16 %v1023
      %v1101 = vunpack.c.l.b16 %v1024
      %v1102 = vunpack.c.h.b16 %v1024
      %v1103 = vunpack.c.l.b16 %v1025
      %v1104 = vunpack.c.h.b16 %v1025
      %v1105 = vunpack.c.l.b16 %v1026
      %v1106 = vunpack.c.h.b16 %v1026
      %v1107 = vunpack.c.l.b16 %v1027
      %v1108 = vunpack.c.h.b16 %v1027
      %v1109 = vunpack.c.l.b16 %v1028
      %v1110 = vunpack.c.h.b16 %v1028
      %v1111 = vunpack.c.l.b16 %v1029
      %v1112 = vunpack.c.h.b16 %v1029
      %v1113 = vunpack.c.l.b16 %v1030
      %v1114 = vunpack.c.h.b16 %v1030
      %v1115 = vpack.c.b16 %v1063, %v1059
      %v1116 = vpack.c.b16 %v1064, %v1060
      %v1117 = vpack.c.b16 %v1065, %v1061
      %v1118 = vpack.c.b16 %v1066, %v1062
      %v1119 = vpack.c.b16 %v1071, %v1067
      %v1120 = vpack.c.b16 %v1072, %v1068
      %v1121 = vpack.c.b16 %v1073, %v1069
      %v1122 = vpack.c.b16 %v1074, %v1070
      %v1123 = vpack.c.b16 %v1079, %v1075
      %v1124 = vpack.c.b16 %v1080, %v1076
      %v1125 = vpack.c.b16 %v1081, %v1077
      %v1126 = vpack.c.b16 %v1082, %v1078
      %v1127 = vpack.c.b16 %v1087, %v1083
      %v1128 = vpack.c.b16 %v1088, %v1084
      %v1129 = vpack.c.b16 %v1089, %v1085
      %v1130 = vpack.c.b16 %v1090, %v1086
      %v1131 = vpack.c.b16 %v1095, %v1091
      %v1132 = vpack.c.b16 %v1096, %v1092
      %v1133 = vpack.c.b16 %v1097, %v1093
      %v1134 = vpack.c.b16 %v1098, %v1094
      %v1135 = vpack.c.b16 %v1103, %v1099
      %v1136 = vpack.c.b16 %v1104, %v1100
      %v1137 = vpack.c.b16 %v1105, %v1101
      %v1138 = vpack.c.b16 %v1106, %v1102
      %v1139 = vpack.c.b16 %v1111, %v1107
      %v1140 = vpack.c.b16 %v1112, %v1108
      %v1141 = vpack.c.b16 %v1113, %v1109
      %v1142 = vpack.c.b16 %v1114, %v1110
      %v1168 = vsel %vm381, %v1139, 0
      %v1171 = vsel %vm381, %v1140, 0
      %v1174 = vsel %vm381, %v1141, 0
      %v1177 = vsel %vm381, %v1142, 0
      %1179 = vmatprep.subr.bf16.mxu0 %v1116
      %1180 = vmatpush1.bf16.msra.mxu0 %v1115
      %1181 = vmatprep.subr.bf16.mxu0 %v1120
      %1182 = vmatpush1.bf16.msra.mxu0 %v1119
      %1183 = vmatprep.subr.bf16.mxu0 %v1124
      %1184 = vmatpush1.bf16.msra.mxu0 %v1123
      %1185 = vmatprep.subr.bf16.mxu0 %v1128
      %1186 = vmatpush1.bf16.msra.mxu0 %v1127
      %1187 = vmatprep.subr.bf16.mxu0 %v1132
      %1188 = vmatpush1.bf16.msra.mxu0 %v1131
      %1189 = vmatprep.subr.bf16.mxu0 %v1136
      %1190 = vmatpush1.bf16.msra.mxu0 %v1135
      %1191 = vmatprep.subr.bf16.mxu0 %v1171
      %1192 = vmatpush1.bf16.msra.mxu0 %v1168
      %1193 = vmatprep.subr.bf16.mxu0 0
      %1194 = vmatpush1.bf16.msra.mxu0 0
      %1195 = vmatprep.subr.bf16.mxu0 0
      %1196 = vmatpush1.bf16.msra.mxu0 0
      %1197 = vmatprep.subr.bf16.mxu0 0
      %1198 = vmatpush1.bf16.msra.mxu0 0
      %1199 = vmatprep.subr.bf16.mxu0 0
      %1200 = vmatpush1.bf16.msra.mxu0 0
      %1201 = vmatprep.subr.bf16.mxu0 0
      %1202 = vmatpush1.bf16.msra.mxu0 0
      %1203 = vmatprep.subr.bf16.mxu0 0
      %1204 = vmatpush1.bf16.msra.mxu0 0
      %1205 = vmatprep.subr.bf16.mxu0 0
      %1206 = vmatpush1.bf16.msra.mxu0 0
      %1207 = vmatprep.subr.bf16.mxu0 0
      %1208 = vmatpush1.bf16.msra.mxu0 0
      %1209 = vmatprep.subr.bf16.mxu0 0
      %1210 = vmatpush1.bf16.msra.mxu0 0
      %1211 = vmatprep.mubr.bf16.mxu0 0
      %1212 = vmatmul.mubr.bf16.gmra.mrb[0].mxu0 %v379
      %v1213 = vpop.f32.mrb[0].mxu0
      %v1214 = vadd.f32 0.0, %v1213
      %v1215 = vpop.f32.mrb[0].mxu0
      %v1216 = vadd.f32 0.0, %v1215
      %v1217 = vpop.f32.mrb[0].mxu0
      %v1218 = vpop.f32.mrb[0].mxu0
      %1219 = vdwg.mxu0
      %1220 = vmatprep.subr.bf16.mxu0 %v1118
      %1221 = vmatpush1.bf16.msra.mxu0 %v1117
      %1222 = vmatprep.subr.bf16.mxu0 %v1122
      %1223 = vmatpush1.bf16.msra.mxu0 %v1121
      %1224 = vmatprep.subr.bf16.mxu0 %v1126
      %1225 = vmatpush1.bf16.msra.mxu0 %v1125
      %1226 = vmatprep.subr.bf16.mxu0 %v1130
      %1227 = vmatpush1.bf16.msra.mxu0 %v1129
      %1228 = vmatprep.subr.bf16.mxu0 %v1134
      %1229 = vmatpush1.bf16.msra.mxu0 %v1133
      %1230 = vmatprep.subr.bf16.mxu0 %v1138
      %1231 = vmatpush1.bf16.msra.mxu0 %v1137
      %1232 = vmatprep.subr.bf16.mxu0 %v1177
      %1233 = vmatpush1.bf16.msra.mxu0 %v1174
      %1234 = vmatprep.subr.bf16.mxu0 0
      %1235 = vmatpush1.bf16.msra.mxu0 0
      %1236 = vmatprep.subr.bf16.mxu0 0
      %1237 = vmatpush1.bf16.msra.mxu0 0
      %1238 = vmatprep.subr.bf16.mxu0 0
      %1239 = vmatpush1.bf16.msra.mxu0 0
      %1240 = vmatprep.subr.bf16.mxu0 0
      %1241 = vmatpush1.bf16.msra.mxu0 0
      %1242 = vmatprep.subr.bf16.mxu0 0
      %1243 = vmatpush1.bf16.msra.mxu0 0
      %1244 = vmatprep.subr.bf16.mxu0 0
      %1245 = vmatpush1.bf16.msra.mxu0 0
      %1246 = vmatprep.subr.bf16.mxu0 0
      %1247 = vmatpush1.bf16.msra.mxu0 0
      %1248 = vmatprep.subr.bf16.mxu0 0
      %1249 = vmatpush1.bf16.msra.mxu0 0
      %1250 = vmatprep.subr.bf16.mxu0 0
      %1251 = vmatpush1.bf16.msra.mxu0 0
      %1252 = vmatprep.mubr.bf16.mxu0 0
      %1253 = vmatmul.mubr.bf16.gmra.mrb[0].mxu0 %v379
      %v1254 = vpop.f32.mrb[0].mxu0
      %v1255 = vadd.f32 0.0, %v1254
      %v1256 = vpop.f32.mrb[0].mxu0
      %v1257 = vadd.f32 0.0, %v1256
      %v1258 = vpop.f32.mrb[0].mxu0
      %v1259 = vpop.f32.mrb[0].mxu0
      %1260 = vdwg.mxu0
      %v1261 = vmax.f32 %v998, %v1214
      %v1262 = vmax.f32 %v999, %v1216
      %v1263 = vmax.f32 %v1000, %v1255
      %v1264 = vmax.f32 %v1001, %v1257
      %s1265 = scalar_lea.vmem %s198, 896
      %v1266 = vld [vmem:[%s1265] sm:$0xff]
      %v1267 = vld [vmem:[%s1265 + $0x8] sm:$0xff]
      %v1268 = vld [vmem:[%s1265 + $0x10] sm:$0xff]
      %v1269 = vld [vmem:[%s1265 + $0x18] sm:$0xff]
      %v1270 = vld [vmem:[%s1265 + $0x20] sm:$0xff]
      %v1271 = vld [vmem:[%s1265 + $0x28] sm:$0xff]
      %v1272 = vld [vmem:[%s1265 + $0x30] sm:$0xff]
      %v1273 = vld [vmem:[%s1265 + $0x38] sm:$0xff]
      %v1274 = vld [vmem:[%s1265 + $0x40] sm:$0xff]
      %v1275 = vld [vmem:[%s1265 + $0x48] sm:$0xff]
      %v1276 = vld [vmem:[%s1265 + $0x50] sm:$0xff]
      %v1277 = vld [vmem:[%s1265 + $0x58] sm:$0xff]
      %v1278 = vld [vmem:[%s1265 + $0x60] sm:$0xff]
      %v1279 = vld [vmem:[%s1265 + $0x68] sm:$0xff]
      %v1280 = vld [vmem:[%s1265 + $0x70] sm:$0xff]
      %v1281 = vld [vmem:[%s1265 + $0x78] sm:$0xff]
      %v1282 = vld [vmem:[%s1265 + $0x80] sm:$0xff]
      %v1283 = vld [vmem:[%s1265 + $0x88] sm:$0xff]
      %v1284 = vld [vmem:[%s1265 + $0x90] sm:$0xff]
      %v1285 = vld [vmem:[%s1265 + $0x98] sm:$0xff]
      %v1286 = vld [vmem:[%s1265 + $0xa0] sm:$0xff]
      %v1287 = vld [vmem:[%s1265 + $0xa8] sm:$0xff]
      %v1288 = vld [vmem:[%s1265 + $0xb0] sm:$0xff]
      %v1289 = vld [vmem:[%s1265 + $0xb8] sm:$0xff]
      %v1290 = vld [vmem:[%s1265 + $0xc0] sm:$0xff]
      %v1291 = vld [vmem:[%s1265 + $0xc8] sm:$0xff]
      %v1292 = vld [vmem:[%s1265 + $0xd0] sm:$0x33]
      %v1293 = vld [vmem:[%s1265 + $0xd8] sm:$0x33]
      %v1322 = vunpack.c.l.b16 %v1266
      %v1323 = vunpack.c.h.b16 %v1266
      %v1324 = vunpack.c.l.b16 %v1267
      %v1325 = vunpack.c.h.b16 %v1267
      %v1326 = vunpack.c.l.b16 %v1268
      %v1327 = vunpack.c.h.b16 %v1268
      %v1328 = vunpack.c.l.b16 %v1269
      %v1329 = vunpack.c.h.b16 %v1269
      %v1330 = vunpack.c.l.b16 %v1270
      %v1331 = vunpack.c.h.b16 %v1270
      %v1332 = vunpack.c.l.b16 %v1271
      %v1333 = vunpack.c.h.b16 %v1271
      %v1334 = vunpack.c.l.b16 %v1272
      %v1335 = vunpack.c.h.b16 %v1272
      %v1336 = vunpack.c.l.b16 %v1273
      %v1337 = vunpack.c.h.b16 %v1273
      %v1338 = vunpack.c.l.b16 %v1274
      %v1339 = vunpack.c.h.b16 %v1274
      %v1340 = vunpack.c.l.b16 %v1275
      %v1341 = vunpack.c.h.b16 %v1275
      %v1342 = vunpack.c.l.b16 %v1276
      %v1343 = vunpack.c.h.b16 %v1276
      %v1344 = vunpack.c.l.b16 %v1277
      %v1345 = vunpack.c.h.b16 %v1277
      %v1346 = vunpack.c.l.b16 %v1278
      %v1347 = vunpack.c.h.b16 %v1278
      %v1348 = vunpack.c.l.b16 %v1279
      %v1349 = vunpack.c.h.b16 %v1279
      %v1350 = vunpack.c.l.b16 %v1280
      %v1351 = vunpack.c.h.b16 %v1280
      %v1352 = vunpack.c.l.b16 %v1281
      %v1353 = vunpack.c.h.b16 %v1281
      %v1354 = vunpack.c.l.b16 %v1282
      %v1355 = vunpack.c.h.b16 %v1282
      %v1356 = vunpack.c.l.b16 %v1283
      %v1357 = vunpack.c.h.b16 %v1283
      %v1358 = vunpack.c.l.b16 %v1284
      %v1359 = vunpack.c.h.b16 %v1284
      %v1360 = vunpack.c.l.b16 %v1285
      %v1361 = vunpack.c.h.b16 %v1285
      %v1362 = vunpack.c.l.b16 %v1286
      %v1363 = vunpack.c.h.b16 %v1286
      %v1364 = vunpack.c.l.b16 %v1287
      %v1365 = vunpack.c.h.b16 %v1287
      %v1366 = vunpack.c.l.b16 %v1288
      %v1367 = vunpack.c.h.b16 %v1288
      %v1368 = vunpack.c.l.b16 %v1289
      %v1369 = vunpack.c.h.b16 %v1289
      %v1370 = vunpack.c.l.b16 %v1290
      %v1371 = vunpack.c.h.b16 %v1290
      %v1372 = vunpack.c.l.b16 %v1291
      %v1373 = vunpack.c.h.b16 %v1291
      %v1374 = vunpack.c.l.b16 %v1292
      %v1375 = vunpack.c.h.b16 %v1292
      %v1376 = vunpack.c.l.b16 %v1293
      %v1377 = vunpack.c.h.b16 %v1293
      %v1378 = vpack.c.b16 %v1326, %v1322
      %v1379 = vpack.c.b16 %v1327, %v1323
      %v1380 = vpack.c.b16 %v1328, %v1324
      %v1381 = vpack.c.b16 %v1329, %v1325
      %v1382 = vpack.c.b16 %v1334, %v1330
      %v1383 = vpack.c.b16 %v1335, %v1331
      %v1384 = vpack.c.b16 %v1336, %v1332
      %v1385 = vpack.c.b16 %v1337, %v1333
      %v1386 = vpack.c.b16 %v1342, %v1338
      %v1387 = vpack.c.b16 %v1343, %v1339
      %v1388 = vpack.c.b16 %v1344, %v1340
      %v1389 = vpack.c.b16 %v1345, %v1341
      %v1390 = vpack.c.b16 %v1350, %v1346
      %v1391 = vpack.c.b16 %v1351, %v1347
      %v1392 = vpack.c.b16 %v1352, %v1348
      %v1393 = vpack.c.b16 %v1353, %v1349
      %v1394 = vpack.c.b16 %v1358, %v1354
      %v1395 = vpack.c.b16 %v1359, %v1355
      %v1396 = vpack.c.b16 %v1360, %v1356
      %v1397 = vpack.c.b16 %v1361, %v1357
      %v1398 = vpack.c.b16 %v1366, %v1362
      %v1399 = vpack.c.b16 %v1367, %v1363
      %v1400 = vpack.c.b16 %v1368, %v1364
      %v1401 = vpack.c.b16 %v1369, %v1365
      %v1402 = vpack.c.b16 %v1374, %v1370
      %v1403 = vpack.c.b16 %v1375, %v1371
      %v1404 = vpack.c.b16 %v1376, %v1372
      %v1405 = vpack.c.b16 %v1377, %v1373
      %v1431 = vsel %vm381, %v1402, 0
      %v1434 = vsel %vm381, %v1403, 0
      %v1437 = vsel %vm381, %v1404, 0
      %v1440 = vsel %vm381, %v1405, 0
      %1442 = vmatprep.subr.bf16.mxu0 %v1379
      %1443 = vmatpush1.bf16.msra.mxu0 %v1378
      %1444 = vmatprep.subr.bf16.mxu0 %v1383
      %1445 = vmatpush1.bf16.msra.mxu0 %v1382
      %1446 = vmatprep.subr.bf16.mxu0 %v1387
      %1447 = vmatpush1.bf16.msra.mxu0 %v1386
      %1448 = vmatprep.subr.bf16.mxu0 %v1391
      %1449 = vmatpush1.bf16.msra.mxu0 %v1390
      %1450 = vmatprep.subr.bf16.mxu0 %v1395
      %1451 = vmatpush1.bf16.msra.mxu0 %v1394
      %1452 = vmatprep.subr.bf16.mxu0 %v1399
      %1453 = vmatpush1.bf16.msra.mxu0 %v1398
      %1454 = vmatprep.subr.bf16.mxu0 %v1434
      %1455 = vmatpush1.bf16.msra.mxu0 %v1431
      %1456 = vmatprep.subr.bf16.mxu0 0
      %1457 = vmatpush1.bf16.msra.mxu0 0
      %1458 = vmatprep.subr.bf16.mxu0 0
      %1459 = vmatpush1.bf16.msra.mxu0 0
      %1460 = vmatprep.subr.bf16.mxu0 0
      %1461 = vmatpush1.bf16.msra.mxu0 0
      %1462 = vmatprep.subr.bf16.mxu0 0
      %1463 = vmatpush1.bf16.msra.mxu0 0
      %1464 = vmatprep.subr.bf16.mxu0 0
      %1465 = vmatpush1.bf16.msra.mxu0 0
      %1466 = vmatprep.subr.bf16.mxu0 0
      %1467 = vmatpush1.bf16.msra.mxu0 0
      %1468 = vmatprep.subr.bf16.mxu0 0
      %1469 = vmatpush1.bf16.msra.mxu0 0
      %1470 = vmatprep.subr.bf16.mxu0 0
      %1471 = vmatpush1.bf16.msra.mxu0 0
      %1472 = vmatprep.subr.bf16.mxu0 0
      %1473 = vmatpush1.bf16.msra.mxu0 0
      %1474 = vmatprep.mubr.bf16.mxu0 0
      %1475 = vmatmul.mubr.bf16.gmra.mrb[0].mxu0 %v379
      %v1476 = vpop.f32.mrb[0].mxu0
      %v1477 = vadd.f32 0.0, %v1476
      %v1478 = vpop.f32.mrb[0].mxu0
      %v1479 = vadd.f32 0.0, %v1478
      %v1480 = vpop.f32.mrb[0].mxu0
      %v1481 = vpop.f32.mrb[0].mxu0
      %1482 = vdwg.mxu0
      %1483 = vmatprep.subr.bf16.mxu0 %v1381
      %1484 = vmatpush1.bf16.msra.mxu0 %v1380
      %1485 = vmatprep.subr.bf16.mxu0 %v1385
      %1486 = vmatpush1.bf16.msra.mxu0 %v1384
      %1487 = vmatprep.subr.bf16.mxu0 %v1389
      %1488 = vmatpush1.bf16.msra.mxu0 %v1388
      %1489 = vmatprep.subr.bf16.mxu0 %v1393
      %1490 = vmatpush1.bf16.msra.mxu0 %v1392
      %1491 = vmatprep.subr.bf16.mxu0 %v1397
      %1492 = vmatpush1.bf16.msra.mxu0 %v1396
      %1493 = vmatprep.subr.bf16.mxu0 %v1401
      %1494 = vmatpush1.bf16.msra.mxu0 %v1400
      %1495 = vmatprep.subr.bf16.mxu0 %v1440
      %1496 = vmatpush1.bf16.msra.mxu0 %v1437
      %1497 = vmatprep.subr.bf16.mxu0 0
      %1498 = vmatpush1.bf16.msra.mxu0 0
      %1499 = vmatprep.subr.bf16.mxu0 0
      %1500 = vmatpush1.bf16.msra.mxu0 0
      %1501 = vmatprep.subr.bf16.mxu0 0
      %1502 = vmatpush1.bf16.msra.mxu0 0
      %1503 = vmatprep.subr.bf16.mxu0 0
      %1504 = vmatpush1.bf16.msra.mxu0 0
      %1505 = vmatprep.subr.bf16.mxu0 0
      %1506 = vmatpush1.bf16.msra.mxu0 0
      %1507 = vmatprep.subr.bf16.mxu0 0
      %1508 = vmatpush1.bf16.msra.mxu0 0
      %1509 = vmatprep.subr.bf16.mxu0 0
      %1510 = vmatpush1.bf16.msra.mxu0 0
      %1511 = vmatprep.subr.bf16.mxu0 0
      %1512 = vmatpush1.bf16.msra.mxu0 0
      %1513 = vmatprep.subr.bf16.mxu0 0
      %1514 = vmatpush1.bf16.msra.mxu0 0
      %1515 = vmatprep.mubr.bf16.mxu0 0
      %1516 = vmatmul.mubr.bf16.gmra.mrb[0].mxu0 %v379
      %v1517 = vpop.f32.mrb[0].mxu0
      %v1518 = vadd.f32 0.0, %v1517
      %v1519 = vpop.f32.mrb[0].mxu0
      %v1520 = vadd.f32 0.0, %v1519
      %v1521 = vpop.f32.mrb[0].mxu0
      %v1522 = vpop.f32.mrb[0].mxu0
      %1523 = vdwg.mxu0
      %v1524 = vmax.f32 %v1261, %v1477
      %v1525 = vmax.f32 %v1262, %v1479
      %v1526 = vmax.f32 %v1263, %v1518
      %v1527 = vmax.f32 %v1264, %v1520
      %s1528 = scalar_lea.vmem %s198, 1120
      %v1529 = vld [vmem:[%s1528] sm:$0xff]
      %v1530 = vld [vmem:[%s1528 + $0x8] sm:$0xff]
      %v1531 = vld [vmem:[%s1528 + $0x10] sm:$0xff]
      %v1532 = vld [vmem:[%s1528 + $0x18] sm:$0xff]
      %v1533 = vld [vmem:[%s1528 + $0x20] sm:$0xff]
      %v1534 = vld [vmem:[%s1528 + $0x28] sm:$0xff]
      %v1535 = vld [vmem:[%s1528 + $0x30] sm:$0xff]
      %v1536 = vld [vmem:[%s1528 + $0x38] sm:$0xff]
      %v1537 = vld [vmem:[%s1528 + $0x40] sm:$0xff]
      %v1538 = vld [vmem:[%s1528 + $0x48] sm:$0xff]
      %v1539 = vld [vmem:[%s1528 + $0x50] sm:$0xff]
      %v1540 = vld [vmem:[%s1528 + $0x58] sm:$0xff]
      %v1541 = vld [vmem:[%s1528 + $0x60] sm:$0xff]
      %v1542 = vld [vmem:[%s1528 + $0x68] sm:$0xff]
      %v1543 = vld [vmem:[%s1528 + $0x70] sm:$0xff]
      %v1544 = vld [vmem:[%s1528 + $0x78] sm:$0xff]
      %v1545 = vld [vmem:[%s1528 + $0x80] sm:$0xff]
      %v1546 = vld [vmem:[%s1528 + $0x88] sm:$0xff]
      %v1547 = vld [vmem:[%s1528 + $0x90] sm:$0xff]
      %v1548 = vld [vmem:[%s1528 + $0x98] sm:$0xff]
      %v1549 = vld [vmem:[%s1528 + $0xa0] sm:$0xff]
      %v1550 = vld [vmem:[%s1528 + $0xa8] sm:$0xff]
      %v1551 = vld [vmem:[%s1528 + $0xb0] sm:$0xff]
      %v1552 = vld [vmem:[%s1528 + $0xb8] sm:$0xff]
      %v1553 = vld [vmem:[%s1528 + $0xc0] sm:$0xff]
      %v1554 = vld [vmem:[%s1528 + $0xc8] sm:$0xff]
      %v1555 = vld [vmem:[%s1528 + $0xd0] sm:$0x33]
      %v1556 = vld [vmem:[%s1528 + $0xd8] sm:$0x33]
      %v1585 = vunpack.c.l.b16 %v1529
      %v1586 = vunpack.c.h.b16 %v1529
      %v1587 = vunpack.c.l.b16 %v1530
      %v1588 = vunpack.c.h.b16 %v1530
      %v1589 = vunpack.c.l.b16 %v1531
      %v1590 = vunpack.c.h.b16 %v1531
      %v1591 = vunpack.c.l.b16 %v1532
      %v1592 = vunpack.c.h.b16 %v1532
      %v1593 = vunpack.c.l.b16 %v1533
      %v1594 = vunpack.c.h.b16 %v1533
      %v1595 = vunpack.c.l.b16 %v1534
      %v1596 = vunpack.c.h.b16 %v1534
      %v1597 = vunpack.c.l.b16 %v1535
      %v1598 = vunpack.c.h.b16 %v1535
      %v1599 = vunpack.c.l.b16 %v1536
      %v1600 = vunpack.c.h.b16 %v1536
      %v1601 = vunpack.c.l.b16 %v1537
      %v1602 = vunpack.c.h.b16 %v1537
      %v1603 = vunpack.c.l.b16 %v1538
      %v1604 = vunpack.c.h.b16 %v1538
      %v1605 = vunpack.c.l.b16 %v1539
      %v1606 = vunpack.c.h.b16 %v1539
      %v1607 = vunpack.c.l.b16 %v1540
      %v1608 = vunpack.c.h.b16 %v1540
      %v1609 = vunpack.c.l.b16 %v1541
      %v1610 = vunpack.c.h.b16 %v1541
      %v1611 = vunpack.c.l.b16 %v1542
      %v1612 = vunpack.c.h.b16 %v1542
      %v1613 = vunpack.c.l.b16 %v1543
      %v1614 = vunpack.c.h.b16 %v1543
      %v1615 = vunpack.c.l.b16 %v1544
      %v1616 = vunpack.c.h.b16 %v1544
      %v1617 = vunpack.c.l.b16 %v1545
      %v1618 = vunpack.c.h.b16 %v1545
      %v1619 = vunpack.c.l.b16 %v1546
      %v1620 = vunpack.c.h.b16 %v1546
      %v1621 = vunpack.c.l.b16 %v1547
      %v1622 = vunpack.c.h.b16 %v1547
      %v1623 = vunpack.c.l.b16 %v1548
      %v1624 = vunpack.c.h.b16 %v1548
      %v1625 = vunpack.c.l.b16 %v1549
      %v1626 = vunpack.c.h.b16 %v1549
      %v1627 = vunpack.c.l.b16 %v1550
      %v1628 = vunpack.c.h.b16 %v1550
      %v1629 = vunpack.c.l.b16 %v1551
      %v1630 = vunpack.c.h.b16 %v1551
      %v1631 = vunpack.c.l.b16 %v1552
      %v1632 = vunpack.c.h.b16 %v1552
      %v1633 = vunpack.c.l.b16 %v1553
      %v1634 = vunpack.c.h.b16 %v1553
      %v1635 = vunpack.c.l.b16 %v1554
      %v1636 = vunpack.c.h.b16 %v1554
      %v1637 = vunpack.c.l.b16 %v1555
      %v1638 = vunpack.c.h.b16 %v1555
      %v1639 = vunpack.c.l.b16 %v1556
      %v1640 = vunpack.c.h.b16 %v1556
      %v1641 = vpack.c.b16 %v1589, %v1585
      %v1642 = vpack.c.b16 %v1590, %v1586
      %v1643 = vpack.c.b16 %v1591, %v1587
      %v1644 = vpack.c.b16 %v1592, %v1588
      %v1645 = vpack.c.b16 %v1597, %v1593
      %v1646 = vpack.c.b16 %v1598, %v1594
      %v1647 = vpack.c.b16 %v1599, %v1595
      %v1648 = vpack.c.b16 %v1600, %v1596
      %v1649 = vpack.c.b16 %v1605, %v1601
      %v1650 = vpack.c.b16 %v1606, %v1602
      %v1651 = vpack.c.b16 %v1607, %v1603
      %v1652 = vpack.c.b16 %v1608, %v1604
      %v1653 = vpack.c.b16 %v1613, %v1609
      %v1654 = vpack.c.b16 %v1614, %v1610
      %v1655 = vpack.c.b16 %v1615, %v1611
      %v1656 = vpack.c.b16 %v1616, %v1612
      %v1657 = vpack.c.b16 %v1621, %v1617
      %v1658 = vpack.c.b16 %v1622, %v1618
      %v1659 = vpack.c.b16 %v1623, %v1619
      %v1660 = vpack.c.b16 %v1624, %v1620
      %v1661 = vpack.c.b16 %v1629, %v1625
      %v1662 = vpack.c.b16 %v1630, %v1626
      %v1663 = vpack.c.b16 %v1631, %v1627
      %v1664 = vpack.c.b16 %v1632, %v1628
      %v1665 = vpack.c.b16 %v1637, %v1633
      %v1666 = vpack.c.b16 %v1638, %v1634
      %v1667 = vpack.c.b16 %v1639, %v1635
      %v1668 = vpack.c.b16 %v1640, %v1636
      %v1694 = vsel %vm381, %v1665, 0
      %v1697 = vsel %vm381, %v1666, 0
      %v1700 = vsel %vm381, %v1667, 0
      %v1703 = vsel %vm381, %v1668, 0
      %1705 = vmatprep.subr.bf16.mxu0 %v1642
      %1706 = vmatpush1.bf16.msra.mxu0 %v1641
      %1707 = vmatprep.subr.bf16.mxu0 %v1646
      %1708 = vmatpush1.bf16.msra.mxu0 %v1645
      %1709 = vmatprep.subr.bf16.mxu0 %v1650
      %1710 = vmatpush1.bf16.msra.mxu0 %v1649
      %1711 = vmatprep.subr.bf16.mxu0 %v1654
      %1712 = vmatpush1.bf16.msra.mxu0 %v1653
      %1713 = vmatprep.subr.bf16.mxu0 %v1658
      %1714 = vmatpush1.bf16.msra.mxu0 %v1657
      %1715 = vmatprep.subr.bf16.mxu0 %v1662
      %1716 = vmatpush1.bf16.msra.mxu0 %v1661
      %1717 = vmatprep.subr.bf16.mxu0 %v1697
      %1718 = vmatpush1.bf16.msra.mxu0 %v1694
      %1719 = vmatprep.subr.bf16.mxu0 0
      %1720 = vmatpush1.bf16.msra.mxu0 0
      %1721 = vmatprep.subr.bf16.mxu0 0
      %1722 = vmatpush1.bf16.msra.mxu0 0
      %1723 = vmatprep.subr.bf16.mxu0 0
      %1724 = vmatpush1.bf16.msra.mxu0 0
      %1725 = vmatprep.subr.bf16.mxu0 0
      %1726 = vmatpush1.bf16.msra.mxu0 0
      %1727 = vmatprep.subr.bf16.mxu0 0
      %1728 = vmatpush1.bf16.msra.mxu0 0
      %1729 = vmatprep.subr.bf16.mxu0 0
      %1730 = vmatpush1.bf16.msra.mxu0 0
      %1731 = vmatprep.subr.bf16.mxu0 0
      %1732 = vmatpush1.bf16.msra.mxu0 0
      %1733 = vmatprep.subr.bf16.mxu0 0
      %1734 = vmatpush1.bf16.msra.mxu0 0
      %1735 = vmatprep.subr.bf16.mxu0 0
      %1736 = vmatpush1.bf16.msra.mxu0 0
      %1737 = vmatprep.mubr.bf16.mxu0 0
      %1738 = vmatmul.mubr.bf16.gmra.mrb[0].mxu0 %v379
      %v1739 = vpop.f32.mrb[0].mxu0
      %v1740 = vadd.f32 0.0, %v1739
      %v1741 = vpop.f32.mrb[0].mxu0
      %v1742 = vadd.f32 0.0, %v1741
      %v1743 = vpop.f32.mrb[0].mxu0
      %v1744 = vpop.f32.mrb[0].mxu0
      %1745 = vdwg.mxu0
      %1746 = vmatprep.subr.bf16.mxu0 %v1644
      %1747 = vmatpush1.bf16.msra.mxu0 %v1643
      %1748 = vmatprep.subr.bf16.mxu0 %v1648
      %1749 = vmatpush1.bf16.msra.mxu0 %v1647
      %1750 = vmatprep.subr.bf16.mxu0 %v1652
      %1751 = vmatpush1.bf16.msra.mxu0 %v1651
      %1752 = vmatprep.subr.bf16.mxu0 %v1656
      %1753 = vmatpush1.bf16.msra.mxu0 %v1655
      %1754 = vmatprep.subr.bf16.mxu0 %v1660
      %1755 = vmatpush1.bf16.msra.mxu0 %v1659
      %1756 = vmatprep.subr.bf16.mxu0 %v1664
      %1757 = vmatpush1.bf16.msra.mxu0 %v1663
      %1758 = vmatprep.subr.bf16.mxu0 %v1703
      %1759 = vmatpush1.bf16.msra.mxu0 %v1700
      %1760 = vmatprep.subr.bf16.mxu0 0
      %1761 = vmatpush1.bf16.msra.mxu0 0
      %1762 = vmatprep.subr.bf16.mxu0 0
      %1763 = vmatpush1.bf16.msra.mxu0 0
      %1764 = vmatprep.subr.bf16.mxu0 0
      %1765 = vmatpush1.bf16.msra.mxu0 0
      %1766 = vmatprep.subr.bf16.mxu0 0
      %1767 = vmatpush1.bf16.msra.mxu0 0
      %1768 = vmatprep.subr.bf16.mxu0 0
      %1769 = vmatpush1.bf16.msra.mxu0 0
      %1770 = vmatprep.subr.bf16.mxu0 0
      %1771 = vmatpush1.bf16.msra.mxu0 0
      %1772 = vmatprep.subr.bf16.mxu0 0
      %1773 = vmatpush1.bf16.msra.mxu0 0
      %1774 = vmatprep.subr.bf16.mxu0 0
      %1775 = vmatpush1.bf16.msra.mxu0 0
      %1776 = vmatprep.subr.bf16.mxu0 0
      %1777 = vmatpush1.bf16.msra.mxu0 0
      %1778 = vmatprep.mubr.bf16.mxu0 0
      %1779 = vmatmul.mubr.bf16.gmra.mrb[0].mxu0 %v379
      %v1780 = vpop.f32.mrb[0].mxu0
      %v1781 = vadd.f32 0.0, %v1780
      %v1782 = vpop.f32.mrb[0].mxu0
      %v1783 = vadd.f32 0.0, %v1782
      %v1784 = vpop.f32.mrb[0].mxu0
      %v1785 = vpop.f32.mrb[0].mxu0
      %1786 = vdwg.mxu0
      %v1787 = vmax.f32 %v1524, %v1740
      %v1788 = vmax.f32 %v1525, %v1742
      %v1789 = vmax.f32 %v1526, %v1781
      %v1790 = vmax.f32 %v1527, %v1783
      %s1791 = scalar_lea.vmem %s198, 1344
      %v1792 = vld [vmem:[%s1791] sm:$0xff]
      %v1793 = vld [vmem:[%s1791 + $0x8] sm:$0xff]
      %v1794 = vld [vmem:[%s1791 + $0x10] sm:$0xff]
      %v1795 = vld [vmem:[%s1791 + $0x18] sm:$0xff]
      %v1796 = vld [vmem:[%s1791 + $0x20] sm:$0xff]
      %v1797 = vld [vmem:[%s1791 + $0x28] sm:$0xff]
      %v1798 = vld [vmem:[%s1791 + $0x30] sm:$0xff]
      %v1799 = vld [vmem:[%s1791 + $0x38] sm:$0xff]
      %v1800 = vld [vmem:[%s1791 + $0x40] sm:$0xff]
      %v1801 = vld [vmem:[%s1791 + $0x48] sm:$0xff]
      %v1802 = vld [vmem:[%s1791 + $0x50] sm:$0xff]
      %v1803 = vld [vmem:[%s1791 + $0x58] sm:$0xff]
      %v1804 = vld [vmem:[%s1791 + $0x60] sm:$0xff]
      %v1805 = vld [vmem:[%s1791 + $0x68] sm:$0xff]
      %v1806 = vld [vmem:[%s1791 + $0x70] sm:$0xff]
      %v1807 = vld [vmem:[%s1791 + $0x78] sm:$0xff]
      %v1808 = vld [vmem:[%s1791 + $0x80] sm:$0xff]
      %v1809 = vld [vmem:[%s1791 + $0x88] sm:$0xff]
      %v1810 = vld [vmem:[%s1791 + $0x90] sm:$0xff]
      %v1811 = vld [vmem:[%s1791 + $0x98] sm:$0xff]
      %v1812 = vld [vmem:[%s1791 + $0xa0] sm:$0xff]
      %v1813 = vld [vmem:[%s1791 + $0xa8] sm:$0xff]
      %v1814 = vld [vmem:[%s1791 + $0xb0] sm:$0xff]
      %v1815 = vld [vmem:[%s1791 + $0xb8] sm:$0xff]
      %v1816 = vld [vmem:[%s1791 + $0xc0] sm:$0xff]
      %v1817 = vld [vmem:[%s1791 + $0xc8] sm:$0xff]
      %v1818 = vld [vmem:[%s1791 + $0xd0] sm:$0x33]
      %v1819 = vld [vmem:[%s1791 + $0xd8] sm:$0x33]
      %v1848 = vunpack.c.l.b16 %v1792
      %v1849 = vunpack.c.h.b16 %v1792
      %v1850 = vunpack.c.l.b16 %v1793
      %v1851 = vunpack.c.h.b16 %v1793
      %v1852 = vunpack.c.l.b16 %v1794
      %v1853 = vunpack.c.h.b16 %v1794
      %v1854 = vunpack.c.l.b16 %v1795
      %v1855 = vunpack.c.h.b16 %v1795
      %v1856 = vunpack.c.l.b16 %v1796
      %v1857 = vunpack.c.h.b16 %v1796
      %v1858 = vunpack.c.l.b16 %v1797
      %v1859 = vunpack.c.h.b16 %v1797
      %v1860 = vunpack.c.l.b16 %v1798
      %v1861 = vunpack.c.h.b16 %v1798
      %v1862 = vunpack.c.l.b16 %v1799
      %v1863 = vunpack.c.h.b16 %v1799
      %v1864 = vunpack.c.l.b16 %v1800
      %v1865 = vunpack.c.h.b16 %v1800
      %v1866 = vunpack.c.l.b16 %v1801
      %v1867 = vunpack.c.h.b16 %v1801
      %v1868 = vunpack.c.l.b16 %v1802
      %v1869 = vunpack.c.h.b16 %v1802
      %v1870 = vunpack.c.l.b16 %v1803
      %v1871 = vunpack.c.h.b16 %v1803
      %v1872 = vunpack.c.l.b16 %v1804
      %v1873 = vunpack.c.h.b16 %v1804
      %v1874 = vunpack.c.l.b16 %v1805
      %v1875 = vunpack.c.h.b16 %v1805
      %v1876 = vunpack.c.l.b16 %v1806
      %v1877 = vunpack.c.h.b16 %v1806
      %v1878 = vunpack.c.l.b16 %v1807
      %v1879 = vunpack.c.h.b16 %v1807
      %v1880 = vunpack.c.l.b16 %v1808
      %v1881 = vunpack.c.h.b16 %v1808
      %v1882 = vunpack.c.l.b16 %v1809
      %v1883 = vunpack.c.h.b16 %v1809
      %v1884 = vunpack.c.l.b16 %v1810
      %v1885 = vunpack.c.h.b16 %v1810
      %v1886 = vunpack.c.l.b16 %v1811
      %v1887 = vunpack.c.h.b16 %v1811
      %v1888 = vunpack.c.l.b16 %v1812
      %v1889 = vunpack.c.h.b16 %v1812
      %v1890 = vunpack.c.l.b16 %v1813
      %v1891 = vunpack.c.h.b16 %v1813
      %v1892 = vunpack.c.l.b16 %v1814
      %v1893 = vunpack.c.h.b16 %v1814
      %v1894 = vunpack.c.l.b16 %v1815
      %v1895 = vunpack.c.h.b16 %v1815
      %v1896 = vunpack.c.l.b16 %v1816
      %v1897 = vunpack.c.h.b16 %v1816
      %v1898 = vunpack.c.l.b16 %v1817
      %v1899 = vunpack.c.h.b16 %v1817
      %v1900 = vunpack.c.l.b16 %v1818
      %v1901 = vunpack.c.h.b16 %v1818
      %v1902 = vunpack.c.l.b16 %v1819
      %v1903 = vunpack.c.h.b16 %v1819
      %v1904 = vpack.c.b16 %v1852, %v1848
      %v1905 = vpack.c.b16 %v1853, %v1849
      %v1906 = vpack.c.b16 %v1854, %v1850
      %v1907 = vpack.c.b16 %v1855, %v1851
      %v1908 = vpack.c.b16 %v1860, %v1856
      %v1909 = vpack.c.b16 %v1861, %v1857
      %v1910 = vpack.c.b16 %v1862, %v1858
      %v1911 = vpack.c.b16 %v1863, %v1859
      %v1912 = vpack.c.b16 %v1868, %v1864
      %v1913 = vpack.c.b16 %v1869, %v1865
      %v1914 = vpack.c.b16 %v1870, %v1866
      %v1915 = vpack.c.b16 %v1871, %v1867
      %v1916 = vpack.c.b16 %v1876, %v1872
      %v1917 = vpack.c.b16 %v1877, %v1873
      %v1918 = vpack.c.b16 %v1878, %v1874
      %v1919 = vpack.c.b16 %v1879, %v1875
      %v1920 = vpack.c.b16 %v1884, %v1880
      %v1921 = vpack.c.b16 %v1885, %v1881
      %v1922 = vpack.c.b16 %v1886, %v1882
      %v1923 = vpack.c.b16 %v1887, %v1883
      %v1924 = vpack.c.b16 %v1892, %v1888
      %v1925 = vpack.c.b16 %v1893, %v1889
      %v1926 = vpack.c.b16 %v1894, %v1890
      %v1927 = vpack.c.b16 %v1895, %v1891
      %v1928 = vpack.c.b16 %v1900, %v1896
      %v1929 = vpack.c.b16 %v1901, %v1897
      %v1930 = vpack.c.b16 %v1902, %v1898
      %v1931 = vpack.c.b16 %v1903, %v1899
      %v1957 = vsel %vm381, %v1928, 0
      %v1960 = vsel %vm381, %v1929, 0
      %v1963 = vsel %vm381, %v1930, 0
      %v1966 = vsel %vm381, %v1931, 0
      %1968 = vmatprep.subr.bf16.mxu0 %v1905
      %1969 = vmatpush1.bf16.msra.mxu0 %v1904
      %1970 = vmatprep.subr.bf16.mxu0 %v1909
      %1971 = vmatpush1.bf16.msra.mxu0 %v1908
      %1972 = vmatprep.subr.bf16.mxu0 %v1913
      %1973 = vmatpush1.bf16.msra.mxu0 %v1912
      %1974 = vmatprep.subr.bf16.mxu0 %v1917
      %1975 = vmatpush1.bf16.msra.mxu0 %v1916
      %1976 = vmatprep.subr.bf16.mxu0 %v1921
      %1977 = vmatpush1.bf16.msra.mxu0 %v1920
      %1978 = vmatprep.subr.bf16.mxu0 %v1925
      %1979 = vmatpush1.bf16.msra.mxu0 %v1924
      %1980 = vmatprep.subr.bf16.mxu0 %v1960
      %1981 = vmatpush1.bf16.msra.mxu0 %v1957
      %1982 = vmatprep.subr.bf16.mxu0 0
      %1983 = vmatpush1.bf16.msra.mxu0 0
      %1984 = vmatprep.subr.bf16.mxu0 0
      %1985 = vmatpush1.bf16.msra.mxu0 0
      %1986 = vmatprep.subr.bf16.mxu0 0
      %1987 = vmatpush1.bf16.msra.mxu0 0
      %1988 = vmatprep.subr.bf16.mxu0 0
      %1989 = vmatpush1.bf16.msra.mxu0 0
      %1990 = vmatprep.subr.bf16.mxu0 0
      %1991 = vmatpush1.bf16.msra.mxu0 0
      %1992 = vmatprep.subr.bf16.mxu0 0
      %1993 = vmatpush1.bf16.msra.mxu0 0
      %1994 = vmatprep.subr.bf16.mxu0 0
      %1995 = vmatpush1.bf16.msra.mxu0 0
      %1996 = vmatprep.subr.bf16.mxu0 0
      %1997 = vmatpush1.bf16.msra.mxu0 0
      %1998 = vmatprep.subr.bf16.mxu0 0
      %1999 = vmatpush1.bf16.msra.mxu0 0
      %2000 = vmatprep.mubr.bf16.mxu0 0
      %2001 = vmatmul.mubr.bf16.gmra.mrb[0].mxu0 %v379
      %v2002 = vpop.f32.mrb[0].mxu0
      %v2003 = vadd.f32 0.0, %v2002
      %v2004 = vpop.f32.mrb[0].mxu0
      %v2005 = vadd.f32 0.0, %v2004
      %v2006 = vpop.f32.mrb[0].mxu0
      %v2007 = vpop.f32.mrb[0].mxu0
      %2008 = vdwg.mxu0
      %2009 = vmatprep.subr.bf16.mxu0 %v1907
      %2010 = vmatpush1.bf16.msra.mxu0 %v1906
      %2011 = vmatprep.subr.bf16.mxu0 %v1911
      %2012 = vmatpush1.bf16.msra.mxu0 %v1910
      %2013 = vmatprep.subr.bf16.mxu0 %v1915
      %2014 = vmatpush1.bf16.msra.mxu0 %v1914
      %2015 = vmatprep.subr.bf16.mxu0 %v1919
      %2016 = vmatpush1.bf16.msra.mxu0 %v1918
      %2017 = vmatprep.subr.bf16.mxu0 %v1923
      %2018 = vmatpush1.bf16.msra.mxu0 %v1922
      %2019 = vmatprep.subr.bf16.mxu0 %v1927
      %2020 = vmatpush1.bf16.msra.mxu0 %v1926
      %2021 = vmatprep.subr.bf16.mxu0 %v1966
      %2022 = vmatpush1.bf16.msra.mxu0 %v1963
      %2023 = vmatprep.subr.bf16.mxu0 0
      %2024 = vmatpush1.bf16.msra.mxu0 0
      %2025 = vmatprep.subr.bf16.mxu0 0
      %2026 = vmatpush1.bf16.msra.mxu0 0
      %2027 = vmatprep.subr.bf16.mxu0 0
      %2028 = vmatpush1.bf16.msra.mxu0 0
      %2029 = vmatprep.subr.bf16.mxu0 0
      %2030 = vmatpush1.bf16.msra.mxu0 0
      %2031 = vmatprep.subr.bf16.mxu0 0
      %2032 = vmatpush1.bf16.msra.mxu0 0
      %2033 = vmatprep.subr.bf16.mxu0 0
      %2034 = vmatpush1.bf16.msra.mxu0 0
      %2035 = vmatprep.subr.bf16.mxu0 0
      %2036 = vmatpush1.bf16.msra.mxu0 0
      %2037 = vmatprep.subr.bf16.mxu0 0
      %2038 = vmatpush1.bf16.msra.mxu0 0
      %2039 = vmatprep.subr.bf16.mxu0 0
      %2040 = vmatpush1.bf16.msra.mxu0 0
      %2041 = vmatprep.mubr.bf16.mxu0 0
      %2042 = vmatmul.mubr.bf16.gmra.mrb[0].mxu0 %v379
      %v2043 = vpop.f32.mrb[0].mxu0
      %v2044 = vadd.f32 0.0, %v2043
      %v2045 = vpop.f32.mrb[0].mxu0
      %v2046 = vadd.f32 0.0, %v2045
      %v2047 = vpop.f32.mrb[0].mxu0
      %v2048 = vpop.f32.mrb[0].mxu0
      %2049 = vdwg.mxu0
      %v2050 = vmax.f32 %v1787, %v2003
      %v2051 = vmax.f32 %v1788, %v2005
      %v2052 = vmax.f32 %v1789, %v2044
      %v2053 = vmax.f32 %v1790, %v2046
      %s2054 = scalar_lea.vmem %s198, 1568
      %v2055 = vld [vmem:[%s2054] sm:$0xff]
      %v2056 = vld [vmem:[%s2054 + $0x8] sm:$0xff]
      %v2057 = vld [vmem:[%s2054 + $0x10] sm:$0xff]
      %v2058 = vld [vmem:[%s2054 + $0x18] sm:$0xff]
      %v2059 = vld [vmem:[%s2054 + $0x20] sm:$0xff]
      %v2060 = vld [vmem:[%s2054 + $0x28] sm:$0xff]
      %v2061 = vld [vmem:[%s2054 + $0x30] sm:$0xff]
      %v2062 = vld [vmem:[%s2054 + $0x38] sm:$0xff]
      %v2063 = vld [vmem:[%s2054 + $0x40] sm:$0xff]
      %v2064 = vld [vmem:[%s2054 + $0x48] sm:$0xff]
      %v2065 = vld [vmem:[%s2054 + $0x50] sm:$0xff]
      %v2066 = vld [vmem:[%s2054 + $0x58] sm:$0xff]
      %v2067 = vld [vmem:[%s2054 + $0x60] sm:$0xff]
      %v2068 = vld [vmem:[%s2054 + $0x68] sm:$0xff]
      %v2069 = vld [vmem:[%s2054 + $0x70] sm:$0xff]
      %v2070 = vld [vmem:[%s2054 + $0x78] sm:$0xff]
      %v2071 = vld [vmem:[%s2054 + $0x80] sm:$0xff]
      %v2072 = vld [vmem:[%s2054 + $0x88] sm:$0xff]
      %v2073 = vld [vmem:[%s2054 + $0x90] sm:$0xff]
      %v2074 = vld [vmem:[%s2054 + $0x98] sm:$0xff]
      %v2075 = vld [vmem:[%s2054 + $0xa0] sm:$0xff]
      %v2076 = vld [vmem:[%s2054 + $0xa8] sm:$0xff]
      %v2077 = vld [vmem:[%s2054 + $0xb0] sm:$0xff]
      %v2078 = vld [vmem:[%s2054 + $0xb8] sm:$0xff]
      %v2079 = vld [vmem:[%s2054 + $0xc0] sm:$0xff]
      %v2080 = vld [vmem:[%s2054 + $0xc8] sm:$0xff]
      %v2081 = vld [vmem:[%s2054 + $0xd0] sm:$0x33]
      %v2082 = vld [vmem:[%s2054 + $0xd8] sm:$0x33]
      %v2111 = vunpack.c.l.b16 %v2055
      %v2112 = vunpack.c.h.b16 %v2055
      %v2113 = vunpack.c.l.b16 %v2056
      %v2114 = vunpack.c.h.b16 %v2056
      %v2115 = vunpack.c.l.b16 %v2057
      %v2116 = vunpack.c.h.b16 %v2057
      %v2117 = vunpack.c.l.b16 %v2058
      %v2118 = vunpack.c.h.b16 %v2058
      %v2119 = vunpack.c.l.b16 %v2059
      %v2120 = vunpack.c.h.b16 %v2059
      %v2121 = vunpack.c.l.b16 %v2060
      %v2122 = vunpack.c.h.b16 %v2060
      %v2123 = vunpack.c.l.b16 %v2061
      %v2124 = vunpack.c.h.b16 %v2061
      %v2125 = vunpack.c.l.b16 %v2062
      %v2126 = vunpack.c.h.b16 %v2062
      %v2127 = vunpack.c.l.b16 %v2063
      %v2128 = vunpack.c.h.b16 %v2063
      %v2129 = vunpack.c.l.b16 %v2064
      %v2130 = vunpack.c.h.b16 %v2064
      %v2131 = vunpack.c.l.b16 %v2065
      %v2132 = vunpack.c.h.b16 %v2065
      %v2133 = vunpack.c.l.b16 %v2066
      %v2134 = vunpack.c.h.b16 %v2066
      %v2135 = vunpack.c.l.b16 %v2067
      %v2136 = vunpack.c.h.b16 %v2067
      %v2137 = vunpack.c.l.b16 %v2068
      %v2138 = vunpack.c.h.b16 %v2068
      %v2139 = vunpack.c.l.b16 %v2069
      %v2140 = vunpack.c.h.b16 %v2069
      %v2141 = vunpack.c.l.b16 %v2070
      %v2142 = vunpack.c.h.b16 %v2070
      %v2143 = vunpack.c.l.b16 %v2071
      %v2144 = vunpack.c.h.b16 %v2071
      %v2145 = vunpack.c.l.b16 %v2072
      %v2146 = vunpack.c.h.b16 %v2072
      %v2147 = vunpack.c.l.b16 %v2073
      %v2148 = vunpack.c.h.b16 %v2073
      %v2149 = vunpack.c.l.b16 %v2074
      %v2150 = vunpack.c.h.b16 %v2074
      %v2151 = vunpack.c.l.b16 %v2075
      %v2152 = vunpack.c.h.b16 %v2075
      %v2153 = vunpack.c.l.b16 %v2076
      %v2154 = vunpack.c.h.b16 %v2076
      %v2155 = vunpack.c.l.b16 %v2077
      %v2156 = vunpack.c.h.b16 %v2077
      %v2157 = vunpack.c.l.b16 %v2078
      %v2158 = vunpack.c.h.b16 %v2078
      %v2159 = vunpack.c.l.b16 %v2079
      %v2160 = vunpack.c.h.b16 %v2079
      %v2161 = vunpack.c.l.b16 %v2080
      %v2162 = vunpack.c.h.b16 %v2080
      %v2163 = vunpack.c.l.b16 %v2081
      %v2164 = vunpack.c.h.b16 %v2081
      %v2165 = vunpack.c.l.b16 %v2082
      %v2166 = vunpack.c.h.b16 %v2082
      %v2167 = vpack.c.b16 %v2115, %v2111
      %v2168 = vpack.c.b16 %v2116, %v2112
      %v2169 = vpack.c.b16 %v2117, %v2113
      %v2170 = vpack.c.b16 %v2118, %v2114
      %v2171 = vpack.c.b16 %v2123, %v2119
      %v2172 = vpack.c.b16 %v2124, %v2120
      %v2173 = vpack.c.b16 %v2125, %v2121
      %v2174 = vpack.c.b16 %v2126, %v2122
      %v2175 = vpack.c.b16 %v2131, %v2127
      %v2176 = vpack.c.b16 %v2132, %v2128
      %v2177 = vpack.c.b16 %v2133, %v2129
      %v2178 = vpack.c.b16 %v2134, %v2130
      %v2179 = vpack.c.b16 %v2139, %v2135
      %v2180 = vpack.c.b16 %v2140, %v2136
      %v2181 = vpack.c.b16 %v2141, %v2137
      %v2182 = vpack.c.b16 %v2142, %v2138
      %v2183 = vpack.c.b16 %v2147, %v2143
      %v2184 = vpack.c.b16 %v2148, %v2144
      %v2185 = vpack.c.b16 %v2149, %v2145
      %v2186 = vpack.c.b16 %v2150, %v2146
      %v2187 = vpack.c.b16 %v2155, %v2151
      %v2188 = vpack.c.b16 %v2156, %v2152
      %v2189 = vpack.c.b16 %v2157, %v2153
      %v2190 = vpack.c.b16 %v2158, %v2154
      %v2191 = vpack.c.b16 %v2163, %v2159
      %v2192 = vpack.c.b16 %v2164, %v2160
      %v2193 = vpack.c.b16 %v2165, %v2161
      %v2194 = vpack.c.b16 %v2166, %v2162
      %v2220 = vsel %vm381, %v2191, 0
      %v2223 = vsel %vm381, %v2192, 0
      %v2226 = vsel %vm381, %v2193, 0
      %v2229 = vsel %vm381, %v2194, 0
      %2231 = vmatprep.subr.bf16.mxu0 %v2168
      %2232 = vmatpush1.bf16.msra.mxu0 %v2167
      %2233 = vmatprep.subr.bf16.mxu0 %v2172
      %2234 = vmatpush1.bf16.msra.mxu0 %v2171
      %2235 = vmatprep.subr.bf16.mxu0 %v2176
      %2236 = vmatpush1.bf16.msra.mxu0 %v2175
      %2237 = vmatprep.subr.bf16.mxu0 %v2180
      %2238 = vmatpush1.bf16.msra.mxu0 %v2179
      %2239 = vmatprep.subr.bf16.mxu0 %v2184
      %2240 = vmatpush1.bf16.msra.mxu0 %v2183
      %2241 = vmatprep.subr.bf16.mxu0 %v2188
      %2242 = vmatpush1.bf16.msra.mxu0 %v2187
      %2243 = vmatprep.subr.bf16.mxu0 %v2223
      %2244 = vmatpush1.bf16.msra.mxu0 %v2220
      %2245 = vmatprep.subr.bf16.mxu0 0
      %2246 = vmatpush1.bf16.msra.mxu0 0
      %2247 = vmatprep.subr.bf16.mxu0 0
      %2248 = vmatpush1.bf16.msra.mxu0 0
      %2249 = vmatprep.subr.bf16.mxu0 0
      %2250 = vmatpush1.bf16.msra.mxu0 0
      %2251 = vmatprep.subr.bf16.mxu0 0
      %2252 = vmatpush1.bf16.msra.mxu0 0
      %2253 = vmatprep.subr.bf16.mxu0 0
      %2254 = vmatpush1.bf16.msra.mxu0 0
      %2255 = vmatprep.subr.bf16.mxu0 0
      %2256 = vmatpush1.bf16.msra.mxu0 0
      %2257 = vmatprep.subr.bf16.mxu0 0
      %2258 = vmatpush1.bf16.msra.mxu0 0
      %2259 = vmatprep.subr.bf16.mxu0 0
      %2260 = vmatpush1.bf16.msra.mxu0 0
      %2261 = vmatprep.subr.bf16.mxu0 0
      %2262 = vmatpush1.bf16.msra.mxu0 0
      %2263 = vmatprep.mubr.bf16.mxu0 0
      %2264 = vmatmul.mubr.bf16.gmra.mrb[0].mxu0 %v379
      %v2265 = vpop.f32.mrb[0].mxu0
      %v2266 = vadd.f32 0.0, %v2265
      %v2267 = vpop.f32.mrb[0].mxu0
      %v2268 = vadd.f32 0.0, %v2267
      %v2269 = vpop.f32.mrb[0].mxu0
      %v2270 = vpop.f32.mrb[0].mxu0
      %2271 = vdwg.mxu0
      %2272 = vmatprep.subr.bf16.mxu0 %v2170
      %2273 = vmatpush1.bf16.msra.mxu0 %v2169
      %2274 = vmatprep.subr.bf16.mxu0 %v2174
      %2275 = vmatpush1.bf16.msra.mxu0 %v2173
      %2276 = vmatprep.subr.bf16.mxu0 %v2178
      %2277 = vmatpush1.bf16.msra.mxu0 %v2177
      %2278 = vmatprep.subr.bf16.mxu0 %v2182
      %2279 = vmatpush1.bf16.msra.mxu0 %v2181
      %2280 = vmatprep.subr.bf16.mxu0 %v2186
      %2281 = vmatpush1.bf16.msra.mxu0 %v2185
      %2282 = vmatprep.subr.bf16.mxu0 %v2190
      %2283 = vmatpush1.bf16.msra.mxu0 %v2189
      %2284 = vmatprep.subr.bf16.mxu0 %v2229
      %2285 = vmatpush1.bf16.msra.mxu0 %v2226
      %2286 = vmatprep.subr.bf16.mxu0 0
      %2287 = vmatpush1.bf16.msra.mxu0 0
      %2288 = vmatprep.subr.bf16.mxu0 0
      %2289 = vmatpush1.bf16.msra.mxu0 0
      %2290 = vmatprep.subr.bf16.mxu0 0
      %2291 = vmatpush1.bf16.msra.mxu0 0
      %2292 = vmatprep.subr.bf16.mxu0 0
      %2293 = vmatpush1.bf16.msra.mxu0 0
      %2294 = vmatprep.subr.bf16.mxu0 0
      %2295 = vmatpush1.bf16.msra.mxu0 0
      %2296 = vmatprep.subr.bf16.mxu0 0
      %2297 = vmatpush1.bf16.msra.mxu0 0
      %2298 = vmatprep.subr.bf16.mxu0 0
      %2299 = vmatpush1.bf16.msra.mxu0 0
      %2300 = vmatprep.subr.bf16.mxu0 0
      %2301 = vmatpush1.bf16.msra.mxu0 0
      %2302 = vmatprep.subr.bf16.mxu0 0
      %2303 = vmatpush1.bf16.msra.mxu0 0
      %2304 = vmatprep.mubr.bf16.mxu0 0
      %2305 = vmatmul.mubr.bf16.gmra.mrb[0].mxu0 %v379
      %v2306 = vpop.f32.mrb[0].mxu0
      %v2307 = vadd.f32 0.0, %v2306
      %v2308 = vpop.f32.mrb[0].mxu0
      %v2309 = vadd.f32 0.0, %v2308
      %v2310 = vpop.f32.mrb[0].mxu0
      %v2311 = vpop.f32.mrb[0].mxu0
      %2312 = vdwg.mxu0
      %v2313 = vmax.f32 %v2050, %v2266
      %v2314 = vmax.f32 %v2051, %v2268
      %v2315 = vmax.f32 %v2052, %v2307
      %v2316 = vmax.f32 %v2053, %v2309
      %2318 = vset.pattern.permute.xlu0 0
      %2319 = vperm.xlu0 %2318, %v212
      %v2320 = vpop.permute.xlu0 %2319
      %v2322 = vadd.f32 %v2313, %v2320
      %v2323 = vadd.f32 %v2314, %v2320
      %v2324 = vadd.f32 %v2315, %v2320
      %v2325 = vadd.f32 %v2316, %v2320
      %vm2326 = vcmp.ge.f32.partialorder %v2322, 0.0
      %vm2327 = vcmp.ge.f32.partialorder %v2323, 0.0
      %vm2328 = vcmp.ge.f32.partialorder %v2324, 0.0
      %vm2329 = vcmp.ge.f32.partialorder %v2325, 0.0
      %v2330 = vmul.f32 %v2322, 0.01
      %v2331 = vmul.f32 %v2323, 0.01
      %v2332 = vmul.f32 %v2324, 0.01
      %v2333 = vmul.f32 %v2325, 0.01
      %v2334 = vsel %vm2326, %v2322, %v2330
      %v2335 = vsel %vm2327, %v2323, %v2331
      %v2336 = vsel %vm2328, %v2324, %v2332
      %v2337 = vsel %vm2329, %v2325, %v2333
      %2338 = vst [vmem:[%s208] sm:$0xff] %v2334
      %2339 = vst [vmem:[%s208 + $0x8] sm:$0xff] %v2335
      %2340 = vst [vmem:[%s208 + $0x10] sm:$0xff] %v2336
      %2341 = vst [vmem:[%s208 + $0x18] sm:$0xff] %v2337
      %s2342 = smul.u32 4, %s19
      %p2343 = scmp.lt.s32.totalorder %s18, 1
      %s2344 = scalar_select %p2343, %s18, 1
      %p2345 = scmp.lt.s32.totalorder %s2342, 3
      %s2346 = scalar_select %p2345, %s2342, 3
      %s2347 = smul.addr %s2344, 4
      %s2348 = sadd.s32 %s2346, %s2347
      %s2349 = smul.addr %s2348, 8
      %s2350 = scalar_lea.vmem %s3, %s2349
      // Predicated region
      $region33: #{cosmoflow_conv_block.1} parent=31 // pred_check
        %p2351 = pneg %p116
      $region34: #{cosmoflow_conv_block.1} parent=31 // pred_check_branch
        %2353 = sbr.rel (%p2351) target = $region36
      $region35: #{cosmoflow_conv_block.1} parent=31 // pred_region
        %s2354 = smul.u32 4, %s19
      $region36: #{cosmoflow_conv_block.1} parent=31 // pred_fallthru
        _
    $region32: #{cosmoflow_conv_block.1} parent=5 // pred_fallthru
      _
    %p2355 = scmp.le.s32.totalorder 2, %s9
    // Predicated region
    $region37: #{cosmoflow_conv_block.1} parent=5 // pred_check
      %p2356 = pneg %p2355
    $region38: #{cosmoflow_conv_block.1} parent=5 // pred_check_branch
      %2358 = sbr.rel (%p2356) target = $region40
    $region39: #{cosmoflow_conv_block.1} parent=5 // pred_region
      %s2359 = ssub.s32 %s9, 2
      // Predicated region
      $region41: #{cosmoflow_conv_block.1} parent=39 // pred_check
        %p2360 = pneg %p122
      $region42: #{cosmoflow_conv_block.1} parent=39 // pred_check_branch
        %2362 = sbr.rel (%p2360) target = $region44
      $region43: #{cosmoflow_conv_block.1} parent=39 // pred_region
        %s2363 = smul.u32 4, %s21
        %p2364 = scmp.lt.s32.totalorder %s20, 1
        %s2365 = scalar_select %p2364, %s20, 1
        %p2366 = scmp.lt.s32.totalorder %s2363, 3
        %s2367 = scalar_select %p2366, %s2363, 3
        %s2368 = smul.addr %s2365, 4
        %s2369 = sadd.s32 %s2367, %s2368
        %s2370 = smul.addr %s2369, 8
        %s2371 = scalar_lea.vmem %s3, %s2370
      $region44: #{cosmoflow_conv_block.1} parent=39 // pred_fallthru
        _
    $region40: #{cosmoflow_conv_block.1} parent=5 // pred_fallthru
      _
  $region6: #{cosmoflow_conv_block.1} parent=0 // loop_footer
    %s13 = sadd.s32 1, %s9
  $region7: #{cosmoflow_conv_block.1} parent=0 // loop_footer_branch
    %8 = sbr.rel target = $region3
  $region8: #{cosmoflow_conv_block.1} parent=0 // loop_exit
    _

</llo_original>
